<compile_context>
chip_gen: v5e
topology: v5e:2x2
jax: 0.10.0
libtpu: 0.0.40
codegen_flags: <defaults>
</compile_context>

<pallas_src>
import functools

import jax
import jax.numpy as jnp
from jax import lax
from jax.experimental import pallas as pl
from jax.experimental.pallas import tpu as pltpu

EPS = 1e-5
NEG_SLOPE = 0.2
LANE = 128


def _convblock_kernel(x_ref, w_ref, o_ref, sum_ref, sq_ref, *,
                      tile_h, width, cin, hw, eps, neg_slope):
    # x_ref  : (1, H+2, W+2, Cin)   padded NHWC image, resident across tiles
    # w_ref  : (9, Cin, Cout_pad)   folded conv weight (tap-major)
    # o_ref  : (1, Cout_pad, HW)    channel-major output, resident across tiles
    # sum_ref/sq_ref : (Cout_pad, 1) f32 running per-channel sum / sum-of-squares
    t = pl.program_id(1)
    n_tiles = pl.num_programs(1)
    tile_hw = tile_h * width

    @pl.when(t == 0)
    def _init():
        sum_ref[...] = jnp.zeros_like(sum_ref)
        sq_ref[...] = jnp.zeros_like(sq_ref)

    row0 = t * tile_h

    # Fused im2col: accumulate 9 shifted matmuls (tileHW, Cin) x (Cin, Cout_pad)
    acc = None
    for k in range(9):
        ky, kx = divmod(k, 3)
        tap = x_ref[0, pl.ds(row0 + ky, tile_h), pl.ds(kx, width), :]  # (tile_h, W, Cin)
        tap = tap.reshape(tile_hw, cin)
        part = jnp.dot(tap, w_ref[k], preferred_element_type=jnp.float32)
        acc = part if acc is None else acc + part                      # (tileHW, Cout_pad) f32

    # Channel-major tile for lane-dense store + per-channel stats.
    y_t = acc.T                                                        # (Cout_pad, tileHW)

    sum_ref[...] += jnp.sum(y_t, axis=1, keepdims=True)
    sq_ref[...] += jnp.sum(y_t * y_t, axis=1, keepdims=True)

    col0 = pl.multiple_of(t * tile_hw, tile_hw)
    o_ref[0, :, pl.ds(col0, tile_hw)] = y_t.astype(o_ref.dtype)

    # Last tile: per-instance, per-channel normalization + LeakyReLU over the
    # whole VMEM-resident output block (written back to HBM once per image).
    @pl.when(t == n_tiles - 1)
    def _finalize():
        inv_hw = 1.0 / float(hw)
        mu = sum_ref[...] * inv_hw                       # (Cout_pad, 1)
        var = sq_ref[...] * inv_hw - mu * mu             # biased variance
        inv_std = lax.rsqrt(var + eps)
        y = o_ref[0]                                     # (Cout_pad, HW)
        y = (y - mu) * inv_std
        y = jnp.where(y >= 0.0, y, neg_slope * y)
        o_ref[0] = y.astype(o_ref.dtype)


def _pick_tile_h(H, W, target_rows=1024):
    best = 1
    for d in range(1, H + 1):
        if H % d == 0 and d * W <= target_rows:
            best = d
    return best


def conv_block_forward(x_nchw, weight, bias=None, *, tile_h=None,
                       compute_dtype=jnp.bfloat16):
    """Forward pass matching PyTorch ConvBlock (Conv3x3 -> InstanceNorm -> LeakyReLU).

    x_nchw : (N, Cin, H, W) float32
    weight : (Cout, Cin, 3, 3)
    bias   : (Cout,) -- accepted for API parity but unused: a per-channel
             constant cancels under InstanceNorm2d(affine=False).
    """
    del bias
    N, Cin, H, W = x_nchw.shape
    Cout = weight.shape[0]
    HW = H * W
    Cout_pad = ((Cout + LANE - 1) // LANE) * LANE

    if tile_h is None:
        tile_h = _pick_tile_h(H, W)
    if H % tile_h != 0:
        raise ValueError(f"tile_h={tile_h} must divide H={H}")
    n_tiles = H // tile_h

    # --- glue: NCHW -> NHWC, spatial zero-pad 1, cast matmul inputs ---
    x = jnp.transpose(x_nchw, (0, 2, 3, 1))                        # (N, H, W, Cin)
    x_pad = jnp.pad(x, ((0, 0), (1, 1), (1, 1), (0, 0))).astype(compute_dtype)

    # fold conv weight: (Cout, Cin, 3, 3) -> (9, Cin, Cout_pad), tap k = ky*3+kx
    w = jnp.transpose(weight, (2, 3, 1, 0)).reshape(9, Cin, Cout)
    w = jnp.pad(w, ((0, 0), (0, 0), (0, Cout_pad - Cout))).astype(compute_dtype)

    kernel = functools.partial(
        _convblock_kernel, tile_h=tile_h, width=W, cin=Cin, hw=HW,
        eps=EPS, neg_slope=NEG_SLOPE)

    out = pl.pallas_call(
        kernel,
        out_shape=jax.ShapeDtypeStruct((N, Cout_pad, HW), jnp.float32),
        grid=(N, n_tiles),
        in_specs=[
            # whole padded image per batch element, resident across the t axis
            pl.BlockSpec((1, H + 2, W + 2, Cin), lambda n, t: (n, 0, 0, 0)),
            # folded weights, resident across the whole grid
            pl.BlockSpec((9, Cin, Cout_pad), lambda n, t: (0, 0, 0)),
        ],
        # channel-major output block, resident across the t (accumulator) axis
        out_specs=pl.BlockSpec((1, Cout_pad, HW), lambda n, t: (n, 0, 0)),
        scratch_shapes=[
            pltpu.VMEM((Cout_pad, 1), jnp.float32),   # running sum
            pltpu.VMEM((Cout_pad, 1), jnp.float32),   # running sum of squares
        ],
        compiler_params=pltpu.CompilerParams(
            dimension_semantics=("parallel", "arbitrary")),
    )(x_pad, w)

    # strip channel padding; (N, Cout, HW) -> (N, Cout, H, W) is a pure reshape
    return out[:, :Cout, :].reshape(N, Cout, H, W)


def conv_block_reference(x_nchw, weight, bias):
    """Pure-JAX reference of the PyTorch forward (for correctness check)."""
    y = lax.conv_general_dilated(
        x_nchw, weight, window_strides=(1, 1), padding="SAME",
        dimension_numbers=("NCHW", "OIHW", "NCHW"))
    y = y + bias.reshape(1, -1, 1, 1)
    mu = jnp.mean(y, axis=(2, 3), keepdims=True)
    var = jnp.mean((y - mu) ** 2, axis=(2, 3), keepdims=True)
    y = (y - mu) / jnp.sqrt(var + EPS)
    return jnp.where(y >= 0, y, NEG_SLOPE * y)


if __name__ == "__main__":
    key = jax.random.PRNGKey(0)
    N, Cin, H, W = 2, 4, 16, 16
    Cout = 8

    kx, kw, kb = jax.random.split(key, 3)
    x = jax.random.normal(kx, (N, Cin, H, W), dtype=jnp.float32)
    weight = 0.1 * jax.random.normal(kw, (Cout, Cin, 3, 3), dtype=jnp.float32)
    bias = 0.1 * jax.random.normal(kb, (Cout,), dtype=jnp.float32)

    ref = conv_block_reference(x, weight, bias)

    # f32 matmul path, 2 spatial tiles (exercises the cross-tile stats path)
    out_f32 = jax.block_until_ready(
        conv_block_forward(x, weight, bias, tile_h=8, compute_dtype=jnp.float32))
    assert out_f32.shape == (N, Cout, H, W)
    err = float(jnp.max(jnp.abs(out_f32 - ref)))
    assert err < 1e-3, f"f32 multi-tile max err {err}"

    # f32 matmul path, single tile (default tile_h picks the whole image here)
    out_one = jax.block_until_ready(
        conv_block_forward(x, weight, bias, compute_dtype=jnp.float32))
    err_one = float(jnp.max(jnp.abs(out_one - ref)))
    assert err_one < 1e-3, f"f32 single-tile max err {err_one}"

    # bf16 matmul inputs (default, per v6e/v7x feedback), f32 accumulation/norm
    out_bf16 = jax.block_until_ready(conv_block_forward(x, weight, bias, tile_h=8))
    err_bf = float(jnp.max(jnp.abs(out_bf16 - ref)))
    assert err_bf < 5e-2, f"bf16 max err {err_bf}"

    print("KERNEL_OK")
</pallas_src>

<mosaic_0001>
module attributes {stable_mosaic.version = 11 : i64} {
  func.func @_convblock_kernel(%arg0: i32, %arg1: i32, %arg2: memref<1x18x18x4xf32, #tpu.memory_space<vmem>>, %arg3: memref<9x4x128xf32, #tpu.memory_space<vmem>>, %arg4: memref<1x128x256xf32, #tpu.memory_space<vmem>>, %arg5: memref<128x1xf32, #tpu.memory_space<vmem>>, %arg6: memref<128x1xf32, #tpu.memory_space<vmem>>) attributes {dimension_semantics = [#tpu.dimension_semantics<parallel>, #tpu.dimension_semantics<arbitrary>], iteration_bounds = array<i64: 2, 2>, scalar_prefetch = 0 : i64, scratch_operands = 2 : i64, tpu.core_type = #tpu.core_type<tc>, window_params = [{transform_indices = @transform_0, window_bounds = array<i64: 1, 18, 18, 4>}, {pipeline_mode = #tpu.pipeline_mode<synchronous>, transform_indices = @transform_1, window_bounds = array<i64: 9, 4, 128>}, {transform_indices = @transform_2, window_bounds = array<i64: 1, 128, 256>}]} {
    %c0_i32 = arith.constant 0 : i32
    %0 = arith.cmpi eq, %arg1, %c0_i32 : i32
    %1 = arith.extui %0 : i1 to i32
    %c0_i32_0 = arith.constant 0 : i32
    %2 = arith.cmpi ne, %1, %c0_i32_0 : i32
    scf.if %2 {
      %cst_75 = arith.constant 0.000000e+00 : f32
      %105 = vector.broadcast %cst_75 : f32 to vector<128x1xf32>
      %c0_76 = arith.constant 0 : index
      %c0_77 = arith.constant 0 : index
      %106 = vector.load %arg5[%c0_76, %c0_77] : memref<128x1xf32, #tpu.memory_space<vmem>>, vector<128x1xf32>
      tpu.vector_store %arg5[%c0_76, %c0_77], %105 {strides = array<i32>} : memref<128x1xf32, #tpu.memory_space<vmem>>, vector<128x1xf32>,
      %cst_78 = arith.constant 0.000000e+00 : f32
      %107 = vector.broadcast %cst_78 : f32 to vector<128x1xf32>
      %c0_79 = arith.constant 0 : index
      %c0_80 = arith.constant 0 : index
      %108 = vector.load %arg6[%c0_79, %c0_80] : memref<128x1xf32, #tpu.memory_space<vmem>>, vector<128x1xf32>
      tpu.vector_store %arg6[%c0_79, %c0_80], %107 {strides = array<i32>} : memref<128x1xf32, #tpu.memory_space<vmem>>, vector<128x1xf32>,
    } else {
    }
    %c8_i32 = arith.constant 8 : i32
    %3 = arith.muli %arg1, %c8_i32 : i32
    %c0_i32_1 = arith.constant 0 : i32
    %4 = arith.addi %3, %c0_i32_1 : i32
    %c0 = arith.constant 0 : index
    %5 = arith.index_cast %4 : i32 to index
    %c0_2 = arith.constant 0 : index
    %c0_3 = arith.constant 0 : index
    %6 = vector.load %arg2[%c0, %5, %c0_2, %c0_3] : memref<1x18x18x4xf32, #tpu.memory_space<vmem>>, vector<1x8x16x4xf32>
    %7 = vector.shape_cast %6 : vector<1x8x16x4xf32> to vector<8x16x4xf32>
    %8 = vector.shape_cast %7 : vector<8x16x4xf32> to vector<128x4xf32>
    %c0_4 = arith.constant 0 : index
    %c0_5 = arith.constant 0 : index
    %c0_6 = arith.constant 0 : index
    %9 = vector.load %arg3[%c0_4, %c0_5, %c0_6] : memref<9x4x128xf32, #tpu.memory_space<vmem>>, vector<1x4x128xf32>
    %10 = vector.shape_cast %9 : vector<1x4x128xf32> to vector<4x128xf32>
    %cst = arith.constant dense<0.000000e+00> : vector<128x128xf32>
    %11 = tpu.matmul %8, %10, %cst {dimension_numbers = #tpu.dot_dimension_numbers<[1], [0], [0], [1], [0, 0, 1, 1], [], []>} : vector<128x4xf32>, vector<4x128xf32>, vector<128x128xf32> -> vector<128x128xf32>
    %c0_i32_7 = arith.constant 0 : i32
    %12 = arith.addi %3, %c0_i32_7 : i32
    %c0_8 = arith.constant 0 : index
    %13 = arith.index_cast %12 : i32 to index
    %c1 = arith.constant 1 : index
    %c0_9 = arith.constant 0 : index
    %14 = vector.load %arg2[%c0_8, %13, %c1, %c0_9] : memref<1x18x18x4xf32, #tpu.memory_space<vmem>>, vector<1x8x16x4xf32>
    %15 = vector.shape_cast %14 : vector<1x8x16x4xf32> to vector<8x16x4xf32>
    %16 = vector.shape_cast %15 : vector<8x16x4xf32> to vector<128x4xf32>
    %c1_10 = arith.constant 1 : index
    %c0_11 = arith.constant 0 : index
    %c0_12 = arith.constant 0 : index
    %17 = vector.load %arg3[%c1_10, %c0_11, %c0_12] : memref<9x4x128xf32, #tpu.memory_space<vmem>>, vector<1x4x128xf32>
    %18 = vector.shape_cast %17 : vector<1x4x128xf32> to vector<4x128xf32>
    %cst_13 = arith.constant dense<0.000000e+00> : vector<128x128xf32>
    %19 = tpu.matmul %16, %18, %cst_13 {dimension_numbers = #tpu.dot_dimension_numbers<[1], [0], [0], [1], [0, 0, 1, 1], [], []>} : vector<128x4xf32>, vector<4x128xf32>, vector<128x128xf32> -> vector<128x128xf32>
    %20 = arith.addf %11, %19 : vector<128x128xf32>
    %c0_i32_14 = arith.constant 0 : i32
    %21 = arith.addi %3, %c0_i32_14 : i32
    %c0_15 = arith.constant 0 : index
    %22 = arith.index_cast %21 : i32 to index
    %c2 = arith.constant 2 : index
    %c0_16 = arith.constant 0 : index
    %23 = vector.load %arg2[%c0_15, %22, %c2, %c0_16] : memref<1x18x18x4xf32, #tpu.memory_space<vmem>>, vector<1x8x16x4xf32>
    %24 = vector.shape_cast %23 : vector<1x8x16x4xf32> to vector<8x16x4xf32>
    %25 = vector.shape_cast %24 : vector<8x16x4xf32> to vector<128x4xf32>
    %c2_17 = arith.constant 2 : index
    %c0_18 = arith.constant 0 : index
    %c0_19 = arith.constant 0 : index
    %26 = vector.load %arg3[%c2_17, %c0_18, %c0_19] : memref<9x4x128xf32, #tpu.memory_space<vmem>>, vector<1x4x128xf32>
    %27 = vector.shape_cast %26 : vector<1x4x128xf32> to vector<4x128xf32>
    %cst_20 = arith.constant dense<0.000000e+00> : vector<128x128xf32>
    %28 = tpu.matmul %25, %27, %cst_20 {dimension_numbers = #tpu.dot_dimension_numbers<[1], [0], [0], [1], [0, 0, 1, 1], [], []>} : vector<128x4xf32>, vector<4x128xf32>, vector<128x128xf32> -> vector<128x128xf32>
    %29 = arith.addf %20, %28 : vector<128x128xf32>
    %c1_i32 = arith.constant 1 : i32
    %30 = arith.addi %3, %c1_i32 : i32
    %c0_21 = arith.constant 0 : index
    %31 = arith.index_cast %30 : i32 to index
    %c0_22 = arith.constant 0 : index
    %c0_23 = arith.constant 0 : index
    %32 = vector.load %arg2[%c0_21, %31, %c0_22, %c0_23] : memref<1x18x18x4xf32, #tpu.memory_space<vmem>>, vector<1x8x16x4xf32>
    %33 = vector.shape_cast %32 : vector<1x8x16x4xf32> to vector<8x16x4xf32>
    %34 = vector.shape_cast %33 : vector<8x16x4xf32> to vector<128x4xf32>
    %c3 = arith.constant 3 : index
    %c0_24 = arith.constant 0 : index
    %c0_25 = arith.constant 0 : index
    %35 = vector.load %arg3[%c3, %c0_24, %c0_25] : memref<9x4x128xf32, #tpu.memory_space<vmem>>, vector<1x4x128xf32>
    %36 = vector.shape_cast %35 : vector<1x4x128xf32> to vector<4x128xf32>
    %cst_26 = arith.constant dense<0.000000e+00> : vector<128x128xf32>
    %37 = tpu.matmul %34, %36, %cst_26 {dimension_numbers = #tpu.dot_dimension_numbers<[1], [0], [0], [1], [0, 0, 1, 1], [], []>} : vector<128x4xf32>, vector<4x128xf32>, vector<128x128xf32> -> vector<128x128xf32>
    %38 = arith.addf %29, %37 : vector<128x128xf32>
    %c1_i32_27 = arith.constant 1 : i32
    %39 = arith.addi %3, %c1_i32_27 : i32
    %c0_28 = arith.constant 0 : index
    %40 = arith.index_cast %39 : i32 to index
    %c1_29 = arith.constant 1 : index
    %c0_30 = arith.constant 0 : index
    %41 = vector.load %arg2[%c0_28, %40, %c1_29, %c0_30] : memref<1x18x18x4xf32, #tpu.memory_space<vmem>>, vector<1x8x16x4xf32>
    %42 = vector.shape_cast %41 : vector<1x8x16x4xf32> to vector<8x16x4xf32>
    %43 = vector.shape_cast %42 : vector<8x16x4xf32> to vector<128x4xf32>
    %c4 = arith.constant 4 : index
    %c0_31 = arith.constant 0 : index
    %c0_32 = arith.constant 0 : index
    %44 = vector.load %arg3[%c4, %c0_31, %c0_32] : memref<9x4x128xf32, #tpu.memory_space<vmem>>, vector<1x4x128xf32>
    %45 = vector.shape_cast %44 : vector<1x4x128xf32> to vector<4x128xf32>
    %cst_33 = arith.constant dense<0.000000e+00> : vector<128x128xf32>
    %46 = tpu.matmul %43, %45, %cst_33 {dimension_numbers = #tpu.dot_dimension_numbers<[1], [0], [0], [1], [0, 0, 1, 1], [], []>} : vector<128x4xf32>, vector<4x128xf32>, vector<128x128xf32> -> vector<128x128xf32>
    %47 = arith.addf %38, %46 : vector<128x128xf32>
    %c1_i32_34 = arith.constant 1 : i32
    %48 = arith.addi %3, %c1_i32_34 : i32
    %c0_35 = arith.constant 0 : index
    %49 = arith.index_cast %48 : i32 to index
    %c2_36 = arith.constant 2 : index
    %c0_37 = arith.constant 0 : index
    %50 = vector.load %arg2[%c0_35, %49, %c2_36, %c0_37] : memref<1x18x18x4xf32, #tpu.memory_space<vmem>>, vector<1x8x16x4xf32>
    %51 = vector.shape_cast %50 : vector<1x8x16x4xf32> to vector<8x16x4xf32>
    %52 = vector.shape_cast %51 : vector<8x16x4xf32> to vector<128x4xf32>
    %c5 = arith.constant 5 : index
    %c0_38 = arith.constant 0 : index
    %c0_39 = arith.constant 0 : index
    %53 = vector.load %arg3[%c5, %c0_38, %c0_39] : memref<9x4x128xf32, #tpu.memory_space<vmem>>, vector<1x4x128xf32>
    %54 = vector.shape_cast %53 : vector<1x4x128xf32> to vector<4x128xf32>
    %cst_40 = arith.constant dense<0.000000e+00> : vector<128x128xf32>
    %55 = tpu.matmul %52, %54, %cst_40 {dimension_numbers = #tpu.dot_dimension_numbers<[1], [0], [0], [1], [0, 0, 1, 1], [], []>} : vector<128x4xf32>, vector<4x128xf32>, vector<128x128xf32> -> vector<128x128xf32>
    %56 = arith.addf %47, %55 : vector<128x128xf32>
    %c2_i32 = arith.constant 2 : i32
    %57 = arith.addi %3, %c2_i32 : i32
    %c0_41 = arith.constant 0 : index
    %58 = arith.index_cast %57 : i32 to index
    %c0_42 = arith.constant 0 : index
    %c0_43 = arith.constant 0 : index
    %59 = vector.load %arg2[%c0_41, %58, %c0_42, %c0_43] : memref<1x18x18x4xf32, #tpu.memory_space<vmem>>, vector<1x8x16x4xf32>
    %60 = vector.shape_cast %59 : vector<1x8x16x4xf32> to vector<8x16x4xf32>
    %61 = vector.shape_cast %60 : vector<8x16x4xf32> to vector<128x4xf32>
    %c6 = arith.constant 6 : index
    %c0_44 = arith.constant 0 : index
    %c0_45 = arith.constant 0 : index
    %62 = vector.load %arg3[%c6, %c0_44, %c0_45] : memref<9x4x128xf32, #tpu.memory_space<vmem>>, vector<1x4x128xf32>
    %63 = vector.shape_cast %62 : vector<1x4x128xf32> to vector<4x128xf32>
    %cst_46 = arith.constant dense<0.000000e+00> : vector<128x128xf32>
    %64 = tpu.matmul %61, %63, %cst_46 {dimension_numbers = #tpu.dot_dimension_numbers<[1], [0], [0], [1], [0, 0, 1, 1], [], []>} : vector<128x4xf32>, vector<4x128xf32>, vector<128x128xf32> -> vector<128x128xf32>
    %65 = arith.addf %56, %64 : vector<128x128xf32>
    %c2_i32_47 = arith.constant 2 : i32
    %66 = arith.addi %3, %c2_i32_47 : i32
    %c0_48 = arith.constant 0 : index
    %67 = arith.index_cast %66 : i32 to index
    %c1_49 = arith.constant 1 : index
    %c0_50 = arith.constant 0 : index
    %68 = vector.load %arg2[%c0_48, %67, %c1_49, %c0_50] : memref<1x18x18x4xf32, #tpu.memory_space<vmem>>, vector<1x8x16x4xf32>
    %69 = vector.shape_cast %68 : vector<1x8x16x4xf32> to vector<8x16x4xf32>
    %70 = vector.shape_cast %69 : vector<8x16x4xf32> to vector<128x4xf32>
    %c7 = arith.constant 7 : index
    %c0_51 = arith.constant 0 : index
    %c0_52 = arith.constant 0 : index
    %71 = vector.load %arg3[%c7, %c0_51, %c0_52] : memref<9x4x128xf32, #tpu.memory_space<vmem>>, vector<1x4x128xf32>
    %72 = vector.shape_cast %71 : vector<1x4x128xf32> to vector<4x128xf32>
    %cst_53 = arith.constant dense<0.000000e+00> : vector<128x128xf32>
    %73 = tpu.matmul %70, %72, %cst_53 {dimension_numbers = #tpu.dot_dimension_numbers<[1], [0], [0], [1], [0, 0, 1, 1], [], []>} : vector<128x4xf32>, vector<4x128xf32>, vector<128x128xf32> -> vector<128x128xf32>
    %74 = arith.addf %65, %73 : vector<128x128xf32>
    %c2_i32_54 = arith.constant 2 : i32
    %75 = arith.addi %3, %c2_i32_54 : i32
    %c0_55 = arith.constant 0 : index
    %76 = arith.index_cast %75 : i32 to index
    %c2_56 = arith.constant 2 : index
    %c0_57 = arith.constant 0 : index
    %77 = vector.load %arg2[%c0_55, %76, %c2_56, %c0_57] : memref<1x18x18x4xf32, #tpu.memory_space<vmem>>, vector<1x8x16x4xf32>
    %78 = vector.shape_cast %77 : vector<1x8x16x4xf32> to vector<8x16x4xf32>
    %79 = vector.shape_cast %78 : vector<8x16x4xf32> to vector<128x4xf32>
    %c8 = arith.constant 8 : index
    %c0_58 = arith.constant 0 : index
    %c0_59 = arith.constant 0 : index
    %80 = vector.load %arg3[%c8, %c0_58, %c0_59] : memref<9x4x128xf32, #tpu.memory_space<vmem>>, vector<1x4x128xf32>
    %81 = vector.shape_cast %80 : vector<1x4x128xf32> to vector<4x128xf32>
    %cst_60 = arith.constant dense<0.000000e+00> : vector<128x128xf32>
    %82 = tpu.matmul %79, %81, %cst_60 {dimension_numbers = #tpu.dot_dimension_numbers<[1], [0], [0], [1], [0, 0, 1, 1], [], []>} : vector<128x4xf32>, vector<4x128xf32>, vector<128x128xf32> -> vector<128x128xf32>
    %83 = arith.addf %74, %82 : vector<128x128xf32>
    %84 = tpu.transpose %83, [1, 0] : vector<128x128xf32> -> vector<128x128xf32>
    %c0_61 = arith.constant 0 : index
    %c0_62 = arith.constant 0 : index
    %85 = vector.load %arg5[%c0_61, %c0_62] : memref<128x1xf32, #tpu.memory_space<vmem>>, vector<128x1xf32>
    %cst_63 = arith.constant dense<0.000000e+00> : vector<128xf32>
    %86 = vector.multi_reduction <add>, %84, %cst_63 [1] : vector<128x128xf32> to vector<128xf32>
    %87 = vector.shape_cast %86 : vector<128xf32> to vector<128x1xf32>
    %88 = arith.addf %85, %87 : vector<128x1xf32>
    %c0_64 = arith.constant 0 : index
    %c0_65 = arith.constant 0 : index
    %89 = vector.load %arg5[%c0_64, %c0_65] : memref<128x1xf32, #tpu.memory_space<vmem>>, vector<128x1xf32>
    tpu.vector_store %arg5[%c0_64, %c0_65], %88 {strides = array<i32>} : memref<128x1xf32, #tpu.memory_space<vmem>>, vector<128x1xf32>,
    %c0_66 = arith.constant 0 : index
    %c0_67 = arith.constant 0 : index
    %90 = vector.load %arg6[%c0_66, %c0_67] : memref<128x1xf32, #tpu.memory_space<vmem>>, vector<128x1xf32>
    %91 = arith.mulf %84, %84 : vector<128x128xf32>
    %cst_68 = arith.constant dense<0.000000e+00> : vector<128xf32>
    %92 = vector.multi_reduction <add>, %91, %cst_68 [1] : vector<128x128xf32> to vector<128xf32>
    %93 = vector.shape_cast %92 : vector<128xf32> to vector<128x1xf32>
    %94 = arith.addf %90, %93 : vector<128x1xf32>
    %c0_69 = arith.constant 0 : index
    %c0_70 = arith.constant 0 : index
    %95 = vector.load %arg6[%c0_69, %c0_70] : memref<128x1xf32, #tpu.memory_space<vmem>>, vector<128x1xf32>
    tpu.vector_store %arg6[%c0_69, %c0_70], %94 {strides = array<i32>} : memref<128x1xf32, #tpu.memory_space<vmem>>, vector<128x1xf32>,
    %c128_i32 = arith.constant 128 : i32
    %96 = arith.muli %arg1, %c128_i32 : i32
    %97 = tpu.assume_multiple %96, 128 : i32
    %c0_71 = arith.constant 0 : index
    %c0_72 = arith.constant 0 : index
    %98 = arith.index_cast %97 : i32 to index
    %99 = vector.load %arg4[%c0_71, %c0_72, %98] : memref<1x128x256xf32, #tpu.memory_space<vmem>>, vector<1x128x128xf32>
    %100 = vector.shape_cast %99 : vector<1x128x128xf32> to vector<128x128xf32>
    %101 = vector.shape_cast %84 : vector<128x128xf32> to vector<1x128x128xf32>
    tpu.vector_store %arg4[%c0_71, %c0_72, %98], %101 {strides = array<i32>} : memref<1x128x256xf32, #tpu.memory_space<vmem>>, vector<1x128x128xf32>,
    %c1_i32_73 = arith.constant 1 : i32
    %102 = arith.cmpi eq, %arg1, %c1_i32_73 : i32
    %103 = arith.extui %102 : i1 to i32
    %c0_i32_74 = arith.constant 0 : i32
    %104 = arith.cmpi ne, %103, %c0_i32_74 : i32
    scf.if %104 {
      %c0_75 = arith.constant 0 : index
      %c0_76 = arith.constant 0 : index
      %105 = vector.load %arg5[%c0_75, %c0_76] : memref<128x1xf32, #tpu.memory_space<vmem>>, vector<128x1xf32>
      %cst_77 = arith.constant 3.906250e-03 : f32
      %106 = vector.broadcast %cst_77 : f32 to vector<128x1xf32>
      %107 = arith.mulf %105, %106 : vector<128x1xf32>
      %c0_78 = arith.constant 0 : index
      %c0_79 = arith.constant 0 : index
      %108 = vector.load %arg6[%c0_78, %c0_79] : memref<128x1xf32, #tpu.memory_space<vmem>>, vector<128x1xf32>
      %cst_80 = arith.constant 3.906250e-03 : f32
      %109 = vector.broadcast %cst_80 : f32 to vector<128x1xf32>
      %110 = arith.mulf %108, %109 : vector<128x1xf32>
      %111 = arith.mulf %107, %107 : vector<128x1xf32>
      %112 = arith.subf %110, %111 : vector<128x1xf32>
      %cst_81 = arith.constant 9.99999974E-6 : f32
      %113 = vector.broadcast %cst_81 : f32 to vector<128x1xf32>
      %114 = arith.addf %112, %113 : vector<128x1xf32>
      %115 = math.rsqrt %114 : vector<128x1xf32>
      %c0_82 = arith.constant 0 : index
      %c0_83 = arith.constant 0 : index
      %c0_84 = arith.constant 0 : index
      %116 = vector.load %arg4[%c0_82, %c0_83, %c0_84] : memref<1x128x256xf32, #tpu.memory_space<vmem>>, vector<1x128x256xf32>
      %117 = vector.shape_cast %116 : vector<1x128x256xf32> to vector<128x256xf32>
      %118 = vector.broadcast %107 : vector<128x1xf32> to vector<128x256xf32>
      %119 = arith.subf %117, %118 : vector<128x256xf32>
      %120 = vector.broadcast %115 : vector<128x1xf32> to vector<128x256xf32>
      %121 = arith.mulf %119, %120 : vector<128x256xf32>
      %cst_85 = arith.constant 0.000000e+00 : f32
      %122 = vector.broadcast %cst_85 : f32 to vector<128x256xf32>
      %123 = arith.cmpf oge, %121, %122 : vector<128x256xf32>
      %cst_86 = arith.constant 2.000000e-01 : f32
      %124 = vector.broadcast %cst_86 : f32 to vector<128x256xf32>
      %125 = arith.mulf %124, %121 : vector<128x256xf32>
      %126 = arith.select %123, %121, %125 : vector<128x256xi1>, vector<128x256xf32>
      %c0_87 = arith.constant 0 : index
      %c0_88 = arith.constant 0 : index
      %c0_89 = arith.constant 0 : index
      %127 = vector.load %arg4[%c0_87, %c0_88, %c0_89] : memref<1x128x256xf32, #tpu.memory_space<vmem>>, vector<1x128x256xf32>
      %128 = vector.shape_cast %127 : vector<1x128x256xf32> to vector<128x256xf32>
      %129 = vector.shape_cast %126 : vector<128x256xf32> to vector<1x128x256xf32>
      tpu.vector_store %arg4[%c0_87, %c0_88, %c0_89], %129 {strides = array<i32>} : memref<1x128x256xf32, #tpu.memory_space<vmem>>, vector<1x128x256xf32>,
    } else {
    }
    return
  }
  func.func @transform_0(%arg0: i32, %arg1: i32) -> (i32, i32, i32, i32) {
    %c0_i32 = arith.constant 0 : i32
    %c0_i32_0 = arith.constant 0 : i32
    %c0_i32_1 = arith.constant 0 : i32
    %c0_i32_2 = arith.constant 0 : i32
    return %arg0, %c0_i32, %c0_i32_0, %c0_i32_1 : i32, i32, i32, i32
  }
  func.func @transform_1(%arg0: i32, %arg1: i32) -> (i32, i32, i32) {
    %c0_i32 = arith.constant 0 : i32
    %c0_i32_0 = arith.constant 0 : i32
    %c0_i32_1 = arith.constant 0 : i32
    %c0_i32_2 = arith.constant 0 : i32
    return %c0_i32, %c0_i32_0, %c0_i32_1 : i32, i32, i32
  }
  func.func @transform_2(%arg0: i32, %arg1: i32) -> (i32, i32, i32) {
    %c0_i32 = arith.constant 0 : i32
    %c0_i32_0 = arith.constant 0 : i32
    %c0_i32_1 = arith.constant 0 : i32
    return %arg0, %c0_i32, %c0_i32_0 : i32, i32, i32
  }
}

</mosaic_0001>

<llo_original>
// kernel: tpu_custom_call.1
$region0: #{tpu_custom_call.1}
  #allocation0 [shape = 'u32[]', space=smem, size = 0x4, offset = 0x4, fixed_abs, tag = 'smem constant byte address 0x4 - core index']
  #allocation1 [shape = 'u32[72,128]{1,0:T(1,128)}', space=vmem, size = 0x9000, scoped, tag = 'internal scratch']
  #allocation2 [shape = 'f32[128,1]{1,0:T(8,128)}', space=vmem, size = 0x10000, scoped, tag = 'scratch operand']
  #allocation3 [shape = 'f32[128,1]{1,0:T(8,128)}', space=vmem, size = 0x10000, scoped, tag = 'scratch operand']
  %s0 = inlined_call_operand.vmem [shape: f32[2,18,18,4], index: 0, kind: input, shape index: {}]
  %s1 = inlined_call_operand.vmem [shape: f32[9,4,128], index: 1, kind: input, shape index: {}]
  %s2 = inlined_call_operand.hbm [shape: f32[2,128,256], index: 2, kind: output, shape index: {}]
  %s3 = sld [smem:[#allocation0]]
  $region49: #{tpu_custom_call.1} parent=0
    _
  %s5 = ssub.s32 1, %s3
  %s6 = scalar_select 0, %s5, %s3
  $region1: #{tpu_custom_call.1} parent=0
    #allocation4 [shape = 'u8[262144]{0}', space=vmem, size = 0x40000, scoped, tag = 'output window, operand 0']
    #allocation5 [shape = 's32[2]{0}', space=sflag, size = 0x8, scoped, tag = 'scoped memory for tpu_custom_call.1']
    %7 = vsyncpa [#allocation5], 0
    %s8 = scalar_lea.sflag [#allocation5], 1
    %9 = vsyncpa %s8, 0
    loop: start=0, step=1, limit=6
    $region2: #{tpu_custom_call.1} parent=1 // loop_pre_header
      _
    $region3: #{tpu_custom_call.1} parent=1 // loop_header
      %s11 = sphi 0, %s15
      %p12 = scmp.ge.s32.totalorder %s11, 6
      %s18 = sphi 0, %s30
      %s19 = sphi 0, %s26
      %s20 = sphi 0, %s18
      %s21 = sphi 0, %s19
      %s22 = sphi 0, %s20
      %s23 = sphi 0, %s21
      %s33 = sphi 0, %s35
      %s36 = sphi 0, %s33
      %s37 = sphi 0, %s36
      %s53 = sphi 0, %s37
      %s57 = sphi 0, %s57
      %s59 = sphi 0, %s57
      %s60 = sphi 0, %s59
      %s74 = sphi 0, %s60
      %s80 = sphi 0, %s82
      %s83 = sphi 0, %s80
      %s84 = sphi 0, %s83
      %s100 = sphi 0, %s84
    $region4: #{tpu_custom_call.1} parent=1 // loop_header_branch
      %14 = sbr.rel (%p12) target = $region8
    $region5: #{tpu_custom_call.1} parent=1 // loop_body
      %s16 = ssub.s32 %s11, 1
      %s17 = ssub.s32 %s11, 2
      %s24 = sadd.s32 1, %s19
      %p25 = scmp.ge.s32.totalorder %s24, 2
      %s26 = scalar_select %p25, 0, %s24
      %s27 = sadd.s32 1, %s18
      %s28 = scalar_select %p25, %s27, %s18
      %p29 = scmp.ge.s32.totalorder %s28, 2
      %s30 = scalar_select %p29, 0, %s28
      %s31 = ssub.s32 %s18, %s30
      %p32 = scmp.eq.s32.totalorder %s31, 0
      %s34 = sadd.s32 %s33, 1
      %s35 = scalar_select %p32, %s33, %s34
      %p38 = pneg %p32
      %p39 = scmp.eq.s32.totalorder %s11, 3
      %p40 = por %p38, %p39
      %p41 = scmp.ne.s32.totalorder %s33, %s36
      %p42 = scmp.eq.s32.totalorder %s11, 0
      %p43 = por %p41, %p42
      %p44 = scmp.ne.s32.totalorder %s33, %s36
      %p45 = scmp.eq.s32.totalorder %s16, 3
      %p46 = por %p44, %p45
      %p47 = scmp.ne.s32.totalorder %s36, %s37
      %p48 = scmp.eq.s32.totalorder %s16, 0
      %p49 = por %p47, %p48
      %p50 = scmp.ne.s32.totalorder %s36, %s37
      %p51 = scmp.eq.s32.totalorder %s17, 3
      %p52 = por %p50, %p51
      %p54 = scmp.ne.s32.totalorder %s37, %s53
      %p55 = scmp.eq.s32.totalorder %s17, 0
      %p56 = por %p54, %p55
      %s58 = sadd.s32 %s57, 1
      %p61 = scmp.eq.s32.totalorder %s11, 3
      %p62 = scmp.ne.s32.totalorder %s57, %s59
      %p63 = scmp.eq.s32.totalorder %s11, 0
      %p64 = por %p62, %p63
      %p65 = scmp.ne.s32.totalorder %s57, %s59
      %p66 = scmp.eq.s32.totalorder %s16, 3
      %p67 = por %p65, %p66
      %p68 = scmp.ne.s32.totalorder %s59, %s60
      %p69 = scmp.eq.s32.totalorder %s16, 0
      %p70 = por %p68, %p69
      %p71 = scmp.ne.s32.totalorder %s59, %s60
      %p72 = scmp.eq.s32.totalorder %s17, 3
      %p73 = por %p71, %p72
      %p75 = scmp.ne.s32.totalorder %s60, %s74
      %p76 = scmp.eq.s32.totalorder %s17, 0
      %p77 = por %p75, %p76
      %s78 = ssub.s32 %s18, %s30
      %p79 = scmp.eq.s32.totalorder %s78, 0
      %s81 = sadd.s32 %s80, 1
      %s82 = scalar_select %p79, %s80, %s81
      %p85 = pneg %p79
      %p86 = scmp.eq.s32.totalorder %s11, 3
      %p87 = por %p85, %p86
      %p88 = scmp.ne.s32.totalorder %s80, %s83
      %p89 = scmp.eq.s32.totalorder %s11, 0
      %p90 = por %p88, %p89
      %p91 = scmp.ne.s32.totalorder %s80, %s83
      %p92 = scmp.eq.s32.totalorder %s16, 3
      %p93 = por %p91, %p92
      %p94 = scmp.ne.s32.totalorder %s83, %s84
      %p95 = scmp.eq.s32.totalorder %s16, 0
      %p96 = por %p94, %p95
      %p97 = scmp.ne.s32.totalorder %s83, %s84
      %p98 = scmp.eq.s32.totalorder %s17, 3
      %p99 = por %p97, %p98
      %p101 = scmp.ne.s32.totalorder %s84, %s100
      %p102 = scmp.eq.s32.totalorder %s17, 0
      %p103 = por %p101, %p102
      %p104 = scmp.le.s32.totalorder 1, %s11
      %p105 = scmp.lt.s32.totalorder %s11, 5
      %p106 = pnand %p104, %p105
      %p107 = pneg %p106
      // Predicated region
      $region9: #{tpu_custom_call.1} parent=5 // pred_check
        _
      $region10: #{tpu_custom_call.1} parent=5 // pred_check_branch
        %109 = sbr.rel (%p106) target = $region12
      $region11: #{tpu_custom_call.1} parent=5 // pred_region
        %s110 = ssub.s32 %s11, 1
        // Predicated region
        $region13: #{tpu_custom_call.1} parent=11 // pred_check
          %p111 = pneg %p70
        $region14: #{tpu_custom_call.1} parent=11 // pred_check_branch
          %113 = sbr.rel (%p111) target = $region16
        $region15: #{tpu_custom_call.1} parent=11 // pred_region
          _
        $region16: #{tpu_custom_call.1} parent=11 // pred_fallthru
          _
      $region12: #{tpu_custom_call.1} parent=5 // pred_fallthru
        _
      %p114 = scmp.lt.s32.totalorder %s11, 4
      // Predicated region
      $region17: #{tpu_custom_call.1} parent=5 // pred_check
        %p115 = pneg %p114
      $region18: #{tpu_custom_call.1} parent=5 // pred_check_branch
        %117 = sbr.rel (%p115) target = $region20
      $region19: #{tpu_custom_call.1} parent=5 // pred_region
        // Predicated region
        $region21: #{tpu_custom_call.1} parent=19 // pred_check
          %p118 = pneg %p43
        $region22: #{tpu_custom_call.1} parent=19 // pred_check_branch
          %120 = sbr.rel (%p118) target = $region24
        $region23: #{tpu_custom_call.1} parent=19 // pred_region
          %p121 = scmp.lt.s32.totalorder %s18, 1
          %s122 = scalar_select %p121, %s18, 1
          %s123 = smul.addr %s122, 54
          %s124 = smul.addr %s123, 8
          %s125 = scalar_lea.vmem %s0, %s124
        $region24: #{tpu_custom_call.1} parent=19 // pred_fallthru
          _
      $region20: #{tpu_custom_call.1} parent=5 // pred_fallthru
        _
      %p126 = scmp.le.s32.totalorder 1, %s11
      %p127 = scmp.lt.s32.totalorder %s11, 5
      %p128 = pnand %p126, %p127
      %p129 = pneg %p128
      // Predicated region
      $region25: #{tpu_custom_call.1} parent=5 // pred_check
        _
      $region26: #{tpu_custom_call.1} parent=5 // pred_check_branch
        %131 = sbr.rel (%p128) target = $region28
      $region27: #{tpu_custom_call.1} parent=5 // pred_region
        %s132 = ssub.s32 %s11, 1
        %p133 = scmp.lt.s32.totalorder %s20, 1
        %s134 = scalar_select %p133, %s20, 1
        %s135 = smul.addr %s134, 54
        %s136 = smul.addr %s135, 8
        %s137 = scalar_lea.vmem %s0, %s136
        %p138 = pneg %p49
        %p139 = pneg %p46
        %p140 = pneg %p70
        %p141 = pneg %p67
        %p142 = pneg %p96
        %p143 = pneg %p93
        %s144 = sand.u32 %s83, 1
        %s145 = scalar_lea.sflag [#allocation5], %s144
        %s146 = sand.u32 %s83, 1
        %s147 = smul.addr %s146, 256
        %s148 = scalar_lea.vmem [#allocation4], %s147
        %p149 = scmp.lt.s32.totalorder %s20, 1
        %s150 = scalar_select %p149, %s20, 1
        %s151 = smul.addr %s150, 54
        %s152 = smul.addr %s151, 8
        %s153 = scalar_lea.vmem %s0, %s152
        %p154 = scmp.eq.s32.totalorder %s21, 0
        // Predicated region
        $region29: #{tpu_custom_call.1} parent=27 // pred_check
          %p155 = pneg %p154
        $region30: #{tpu_custom_call.1} parent=27 // pred_check_branch
          %157 = sbr.rel (%p155) target = $region32
        $region31: #{tpu_custom_call.1} parent=27 // pred_region
          %vm158 = vcmask 7168
          %159 = vst.msk [vmem:[#allocation2] sm:$0xff] %vm158, 0.0
          %160 = vst.msk [vmem:[#allocation2 + $0x8] sm:$0xff] %vm158, 0.0
          %161 = vst.msk [vmem:[#allocation2 + $0x10] sm:$0xff] %vm158, 0.0
          %162 = vst.msk [vmem:[#allocation2 + $0x18] sm:$0xff] %vm158, 0.0
          %163 = vst.msk [vmem:[#allocation2 + $0x20] sm:$0xff] %vm158, 0.0
          %164 = vst.msk [vmem:[#allocation2 + $0x28] sm:$0xff] %vm158, 0.0
          %165 = vst.msk [vmem:[#allocation2 + $0x30] sm:$0xff] %vm158, 0.0
          %166 = vst.msk [vmem:[#allocation2 + $0x38] sm:$0xff] %vm158, 0.0
          %167 = vst.msk [vmem:[#allocation2 + $0x40] sm:$0xff] %vm158, 0.0
          %168 = vst.msk [vmem:[#allocation2 + $0x48] sm:$0xff] %vm158, 0.0
          %169 = vst.msk [vmem:[#allocation2 + $0x50] sm:$0xff] %vm158, 0.0
          %170 = vst.msk [vmem:[#allocation2 + $0x58] sm:$0xff] %vm158, 0.0
          %171 = vst.msk [vmem:[#allocation2 + $0x60] sm:$0xff] %vm158, 0.0
          %172 = vst.msk [vmem:[#allocation2 + $0x68] sm:$0xff] %vm158, 0.0
          %173 = vst.msk [vmem:[#allocation2 + $0x70] sm:$0xff] %vm158, 0.0
          %174 = vst.msk [vmem:[#allocation2 + $0x78] sm:$0xff] %vm158, 0.0
          %175 = vst.msk [vmem:[#allocation3] sm:$0xff] %vm158, 0.0
          %176 = vst.msk [vmem:[#allocation3 + $0x8] sm:$0xff] %vm158, 0.0
          %177 = vst.msk [vmem:[#allocation3 + $0x10] sm:$0xff] %vm158, 0.0
          %178 = vst.msk [vmem:[#allocation3 + $0x18] sm:$0xff] %vm158, 0.0
          %179 = vst.msk [vmem:[#allocation3 + $0x20] sm:$0xff] %vm158, 0.0
          %180 = vst.msk [vmem:[#allocation3 + $0x28] sm:$0xff] %vm158, 0.0
          %181 = vst.msk [vmem:[#allocation3 + $0x30] sm:$0xff] %vm158, 0.0
          %182 = vst.msk [vmem:[#allocation3 + $0x38] sm:$0xff] %vm158, 0.0
          %183 = vst.msk [vmem:[#allocation3 + $0x40] sm:$0xff] %vm158, 0.0
          %184 = vst.msk [vmem:[#allocation3 + $0x48] sm:$0xff] %vm158, 0.0
          %185 = vst.msk [vmem:[#allocation3 + $0x50] sm:$0xff] %vm158, 0.0
          %186 = vst.msk [vmem:[#allocation3 + $0x58] sm:$0xff] %vm158, 0.0
          %187 = vst.msk [vmem:[#allocation3 + $0x60] sm:$0xff] %vm158, 0.0
          %188 = vst.msk [vmem:[#allocation3 + $0x68] sm:$0xff] %vm158, 0.0
          %189 = vst.msk [vmem:[#allocation3 + $0x70] sm:$0xff] %vm158, 0.0
          %190 = vst.msk [vmem:[#allocation3 + $0x78] sm:$0xff] %vm158, 0.0
        $region32: #{tpu_custom_call.1} parent=27 // pred_fallthru
          _
        %s191 = smul.u32 %s21, 8
        %s192 = smul.u32 %s191, 24
        %s193 = scalar_lea.vmem %s153, %s192
        %v194 = vld [vmem:[%s193] sm:$0xff]
        %v195 = vld [vmem:[%s193 + $0x8] sm:$0xff]
        %v196 = vld [vmem:[%s193 + $0x18] sm:$0xff]
        %v197 = vld [vmem:[%s193 + $0x20] sm:$0xff]
        %v198 = vld [vmem:[%s193 + $0x30] sm:$0xff]
        %v199 = vld [vmem:[%s193 + $0x38] sm:$0xff]
        %v200 = vld [vmem:[%s193 + $0x48] sm:$0xff]
        %v201 = vld [vmem:[%s193 + $0x50] sm:$0xff]
        %v202 = vld [vmem:[%s193 + $0x60] sm:$0xff]
        %v203 = vld [vmem:[%s193 + $0x68] sm:$0xff]
        %v204 = vld [vmem:[%s193 + $0x78] sm:$0xff]
        %v205 = vld [vmem:[%s193 + $0x80] sm:$0xff]
        %v206 = vld [vmem:[%s193 + $0x90] sm:$0xff]
        %v207 = vld [vmem:[%s193 + $0x98] sm:$0xff]
        %v208 = vld [vmem:[%s193 + $0xa8] sm:$0xff]
        %v209 = vld [vmem:[%s193 + $0xb0] sm:$0xff]
        %v210 = vld [vmem:[%s1] sm:$0xf]
        %v211 = vld [vmem:[%s193 + $0x1] sm:$0xff]
        %v212 = vld [vmem:[%s193 + $0x9] sm:$0xff]
        %v213 = vld [vmem:[%s193 + $0x19] sm:$0xff]
        %v214 = vld [vmem:[%s193 + $0x21] sm:$0xff]
        %v215 = vld [vmem:[%s193 + $0x31] sm:$0xff]
        %v216 = vld [vmem:[%s193 + $0x39] sm:$0xff]
        %v217 = vld [vmem:[%s193 + $0x49] sm:$0xff]
        %v218 = vld [vmem:[%s193 + $0x51] sm:$0xff]
        %v219 = vld [vmem:[%s193 + $0x61] sm:$0xff]
        %v220 = vld [vmem:[%s193 + $0x69] sm:$0xff]
        %v221 = vld [vmem:[%s193 + $0x79] sm:$0xff]
        %v222 = vld [vmem:[%s193 + $0x81] sm:$0xff]
        %v223 = vld [vmem:[%s193 + $0x91] sm:$0xff]
        %v224 = vld [vmem:[%s193 + $0x99] sm:$0xff]
        %v225 = vld [vmem:[%s193 + $0xa9] sm:$0xff]
        %v226 = vld [vmem:[%s193 + $0xb1] sm:$0xff]
        %s227 = scalar_lea.vmem %s1, 4
        %v228 = vld [vmem:[%s227] sm:$0xf]
        %vm229 = vcmask 31744
        %v231 = vsel %vm229, %v211, 0
        %v234 = vsel %vm229, %v212, 0
        %v237 = vsel %vm229, %v213, 0
        %v240 = vsel %vm229, %v214, 0
        %v243 = vsel %vm229, %v215, 0
        %v246 = vsel %vm229, %v216, 0
        %v249 = vsel %vm229, %v217, 0
        %v252 = vsel %vm229, %v218, 0
        %v255 = vsel %vm229, %v219, 0
        %v258 = vsel %vm229, %v220, 0
        %v261 = vsel %vm229, %v221, 0
        %v264 = vsel %vm229, %v222, 0
        %v267 = vsel %vm229, %v223, 0
        %v270 = vsel %vm229, %v224, 0
        %v273 = vsel %vm229, %v225, 0
        %v276 = vsel %vm229, %v226, 0
        %vm278 = vcmask 1043456
        %v280 = vsel %vm278, %v228, 0
        %282 = vmatpush.msra.mxu0 0.0
        %283 = vmatpush.msra.mxu0 0.0
        %284 = vmatpush.msra.mxu0 0.0
        %285 = vmatpush.msra.mxu0 0.0
        %286 = vmatpush.msra.mxu0 0.0
        %287 = vmatpush.msra.mxu0 0.0
        %288 = vmatpush.msra.mxu0 0.0
        %289 = vmatpush.msra.mxu0 0.0
        %290 = vmatpush.msra.mxu0 0.0
        %291 = vmatpush.msra.mxu0 0.0
        %292 = vmatpush.msra.mxu0 0.0
        %293 = vmatpush.msra.mxu0 0.0
        %294 = vmatpush.msra.mxu0 0.0
        %295 = vmatpush.msra.mxu0 0.0
        %296 = vmatpush.msra.mxu0 0.0
        %297 = vmatpush.msra.mxu0 %v280
        %298 = vmatmul.f32.gmra.mxu0 %v231
        %v299 = vpop.f32.mrf.mxu0
        %v300 = vadd.f32 0.0, %v299
        %301 = vmatmul.f32.gmra.mxu0 %v234
        %v302 = vpop.f32.mrf.mxu0
        %v303 = vadd.f32 0.0, %v302
        %304 = vmatmul.f32.gmra.mxu0 %v237
        %v305 = vpop.f32.mrf.mxu0
        %v306 = vadd.f32 0.0, %v305
        %307 = vmatmul.f32.gmra.mxu0 %v240
        %v308 = vpop.f32.mrf.mxu0
        %v309 = vadd.f32 0.0, %v308
        %310 = vmatmul.f32.gmra.mxu0 %v243
        %v311 = vpop.f32.mrf.mxu0
        %v312 = vadd.f32 0.0, %v311
        %313 = vmatmul.f32.gmra.mxu0 %v246
        %v314 = vpop.f32.mrf.mxu0
        %v315 = vadd.f32 0.0, %v314
        %316 = vmatmul.f32.gmra.mxu0 %v249
        %v317 = vpop.f32.mrf.mxu0
        %v318 = vadd.f32 0.0, %v317
        %319 = vmatmul.f32.gmra.mxu0 %v252
        %v320 = vpop.f32.mrf.mxu0
        %v321 = vadd.f32 0.0, %v320
        %322 = vmatmul.f32.gmra.mxu0 %v255
        %v323 = vpop.f32.mrf.mxu0
        %v324 = vadd.f32 0.0, %v323
        %325 = vmatmul.f32.gmra.mxu0 %v258
        %v326 = vpop.f32.mrf.mxu0
        %v327 = vadd.f32 0.0, %v326
        %328 = vmatmul.f32.gmra.mxu0 %v261
        %v329 = vpop.f32.mrf.mxu0
        %v330 = vadd.f32 0.0, %v329
        %331 = vmatmul.f32.gmra.mxu0 %v264
        %v332 = vpop.f32.mrf.mxu0
        %v333 = vadd.f32 0.0, %v332
        %334 = vmatmul.f32.gmra.mxu0 %v267
        %v335 = vpop.f32.mrf.mxu0
        %v336 = vadd.f32 0.0, %v335
        %337 = vmatmul.f32.gmra.mxu0 %v270
        %v338 = vpop.f32.mrf.mxu0
        %v339 = vadd.f32 0.0, %v338
        %340 = vmatmul.f32.gmra.mxu0 %v273
        %v341 = vpop.f32.mrf.mxu0
        %v342 = vadd.f32 0.0, %v341
        %343 = vmatmul.f32.gmra.mxu0 %v276
        %v344 = vpop.f32.mrf.mxu0
        %v345 = vadd.f32 0.0, %v344
        %346 = vdwg.mxu0
        %v348 = vsel %vm229, %v194, 0
        %v351 = vsel %vm229, %v195, 0
        %v354 = vsel %vm229, %v196, 0
        %v357 = vsel %vm229, %v197, 0
        %v360 = vsel %vm229, %v198, 0
        %v363 = vsel %vm229, %v199, 0
        %v366 = vsel %vm229, %v200, 0
        %v369 = vsel %vm229, %v201, 0
        %v372 = vsel %vm229, %v202, 0
        %v375 = vsel %vm229, %v203, 0
        %v378 = vsel %vm229, %v204, 0
        %v381 = vsel %vm229, %v205, 0
        %v384 = vsel %vm229, %v206, 0
        %v387 = vsel %vm229, %v207, 0
        %v390 = vsel %vm229, %v208, 0
        %v393 = vsel %vm229, %v209, 0
        %v396 = vsel %vm278, %v210, 0
        %398 = vmatpush.msra.mxu0 0.0
        %399 = vmatpush.msra.mxu0 0.0
        %400 = vmatpush.msra.mxu0 0.0
        %401 = vmatpush.msra.mxu0 0.0
        %402 = vmatpush.msra.mxu0 0.0
        %403 = vmatpush.msra.mxu0 0.0
        %404 = vmatpush.msra.mxu0 0.0
        %405 = vmatpush.msra.mxu0 0.0
        %406 = vmatpush.msra.mxu0 0.0
        %407 = vmatpush.msra.mxu0 0.0
        %408 = vmatpush.msra.mxu0 0.0
        %409 = vmatpush.msra.mxu0 0.0
        %410 = vmatpush.msra.mxu0 0.0
        %411 = vmatpush.msra.mxu0 0.0
        %412 = vmatpush.msra.mxu0 0.0
        %413 = vmatpush.msra.mxu0 %v396
        %414 = vmatmul.f32.gmra.mxu0 %v348
        %v415 = vpop.f32.mrf.mxu0
        %v416 = vadd.f32 %v300, %v415
        %417 = vmatmul.f32.gmra.mxu0 %v351
        %v418 = vpop.f32.mrf.mxu0
        %v419 = vadd.f32 %v303, %v418
        %420 = vmatmul.f32.gmra.mxu0 %v354
        %v421 = vpop.f32.mrf.mxu0
        %v422 = vadd.f32 %v306, %v421
        %423 = vmatmul.f32.gmra.mxu0 %v357
        %v424 = vpop.f32.mrf.mxu0
        %v425 = vadd.f32 %v309, %v424
        %426 = vmatmul.f32.gmra.mxu0 %v360
        %v427 = vpop.f32.mrf.mxu0
        %v428 = vadd.f32 %v312, %v427
        %429 = vmatmul.f32.gmra.mxu0 %v363
        %v430 = vpop.f32.mrf.mxu0
        %v431 = vadd.f32 %v315, %v430
        %432 = vmatmul.f32.gmra.mxu0 %v366
        %v433 = vpop.f32.mrf.mxu0
        %v434 = vadd.f32 %v318, %v433
        %435 = vmatmul.f32.gmra.mxu0 %v369
        %v436 = vpop.f32.mrf.mxu0
        %v437 = vadd.f32 %v321, %v436
        %438 = vmatmul.f32.gmra.mxu0 %v372
        %v439 = vpop.f32.mrf.mxu0
        %v440 = vadd.f32 %v324, %v439
        %441 = vmatmul.f32.gmra.mxu0 %v375
        %v442 = vpop.f32.mrf.mxu0
        %v443 = vadd.f32 %v327, %v442
        %444 = vmatmul.f32.gmra.mxu0 %v378
        %v445 = vpop.f32.mrf.mxu0
        %v446 = vadd.f32 %v330, %v445
        %447 = vmatmul.f32.gmra.mxu0 %v381
        %v448 = vpop.f32.mrf.mxu0
        %v449 = vadd.f32 %v333, %v448
        %450 = vmatmul.f32.gmra.mxu0 %v384
        %v451 = vpop.f32.mrf.mxu0
        %v452 = vadd.f32 %v336, %v451
        %453 = vmatmul.f32.gmra.mxu0 %v387
        %v454 = vpop.f32.mrf.mxu0
        %v455 = vadd.f32 %v339, %v454
        %456 = vmatmul.f32.gmra.mxu0 %v390
        %v457 = vpop.f32.mrf.mxu0
        %v458 = vadd.f32 %v342, %v457
        %459 = vmatmul.f32.gmra.mxu0 %v393
        %v460 = vpop.f32.mrf.mxu0
        %v461 = vadd.f32 %v345, %v460
        %462 = vdwg.mxu0
        %v463 = vld [vmem:[%s193 + $0x2] sm:$0xff]
        %v464 = vld [vmem:[%s193 + $0xa] sm:$0xff]
        %v465 = vld [vmem:[%s193 + $0x1a] sm:$0xff]
        %v466 = vld [vmem:[%s193 + $0x22] sm:$0xff]
        %v467 = vld [vmem:[%s193 + $0x32] sm:$0xff]
        %v468 = vld [vmem:[%s193 + $0x3a] sm:$0xff]
        %v469 = vld [vmem:[%s193 + $0x4a] sm:$0xff]
        %v470 = vld [vmem:[%s193 + $0x52] sm:$0xff]
        %v471 = vld [vmem:[%s193 + $0x62] sm:$0xff]
        %v472 = vld [vmem:[%s193 + $0x6a] sm:$0xff]
        %v473 = vld [vmem:[%s193 + $0x7a] sm:$0xff]
        %v474 = vld [vmem:[%s193 + $0x82] sm:$0xff]
        %v475 = vld [vmem:[%s193 + $0x92] sm:$0xff]
        %v476 = vld [vmem:[%s193 + $0x9a] sm:$0xff]
        %v477 = vld [vmem:[%s193 + $0xaa] sm:$0xff]
        %v478 = vld [vmem:[%s193 + $0xb2] sm:$0xff]
        %s479 = scalar_lea.vmem %s1, 8
        %v480 = vld [vmem:[%s479] sm:$0xf]
        %v482 = vsel %vm229, %v463, 0
        %v485 = vsel %vm229, %v464, 0
        %v488 = vsel %vm229, %v465, 0
        %v491 = vsel %vm229, %v466, 0
        %v494 = vsel %vm229, %v467, 0
        %v497 = vsel %vm229, %v468, 0
        %v500 = vsel %vm229, %v469, 0
        %v503 = vsel %vm229, %v470, 0
        %v506 = vsel %vm229, %v471, 0
        %v509 = vsel %vm229, %v472, 0
        %v512 = vsel %vm229, %v473, 0
        %v515 = vsel %vm229, %v474, 0
        %v518 = vsel %vm229, %v475, 0
        %v521 = vsel %vm229, %v476, 0
        %v524 = vsel %vm229, %v477, 0
        %v527 = vsel %vm229, %v478, 0
        %v530 = vsel %vm278, %v480, 0
        %532 = vmatpush.msra.mxu0 0.0
        %533 = vmatpush.msra.mxu0 0.0
        %534 = vmatpush.msra.mxu0 0.0
        %535 = vmatpush.msra.mxu0 0.0
        %536 = vmatpush.msra.mxu0 0.0
        %537 = vmatpush.msra.mxu0 0.0
        %538 = vmatpush.msra.mxu0 0.0
        %539 = vmatpush.msra.mxu0 0.0
        %540 = vmatpush.msra.mxu0 0.0
        %541 = vmatpush.msra.mxu0 0.0
        %542 = vmatpush.msra.mxu0 0.0
        %543 = vmatpush.msra.mxu0 0.0
        %544 = vmatpush.msra.mxu0 0.0
        %545 = vmatpush.msra.mxu0 0.0
        %546 = vmatpush.msra.mxu0 0.0
        %547 = vmatpush.msra.mxu0 %v530
        %548 = vmatmul.f32.gmra.mxu0 %v482
        %v549 = vpop.f32.mrf.mxu0
        %v550 = vadd.f32 0.0, %v549
        %551 = vmatmul.f32.gmra.mxu0 %v485
        %v552 = vpop.f32.mrf.mxu0
        %v553 = vadd.f32 0.0, %v552
        %554 = vmatmul.f32.gmra.mxu0 %v488
        %v555 = vpop.f32.mrf.mxu0
        %v556 = vadd.f32 0.0, %v555
        %557 = vmatmul.f32.gmra.mxu0 %v491
        %v558 = vpop.f32.mrf.mxu0
        %v559 = vadd.f32 0.0, %v558
        %560 = vmatmul.f32.gmra.mxu0 %v494
        %v561 = vpop.f32.mrf.mxu0
        %v562 = vadd.f32 0.0, %v561
        %563 = vmatmul.f32.gmra.mxu0 %v497
        %v564 = vpop.f32.mrf.mxu0
        %v565 = vadd.f32 0.0, %v564
        %566 = vmatmul.f32.gmra.mxu0 %v500
        %v567 = vpop.f32.mrf.mxu0
        %v568 = vadd.f32 0.0, %v567
        %569 = vmatmul.f32.gmra.mxu0 %v503
        %v570 = vpop.f32.mrf.mxu0
        %v571 = vadd.f32 0.0, %v570
        %572 = vmatmul.f32.gmra.mxu0 %v506
        %v573 = vpop.f32.mrf.mxu0
        %v574 = vadd.f32 0.0, %v573
        %575 = vmatmul.f32.gmra.mxu0 %v509
        %v576 = vpop.f32.mrf.mxu0
        %v577 = vadd.f32 0.0, %v576
        %578 = vmatmul.f32.gmra.mxu0 %v512
        %v579 = vpop.f32.mrf.mxu0
        %v580 = vadd.f32 0.0, %v579
        %581 = vmatmul.f32.gmra.mxu0 %v515
        %v582 = vpop.f32.mrf.mxu0
        %v583 = vadd.f32 0.0, %v582
        %584 = vmatmul.f32.gmra.mxu0 %v518
        %v585 = vpop.f32.mrf.mxu0
        %v586 = vadd.f32 0.0, %v585
        %587 = vmatmul.f32.gmra.mxu0 %v521
        %v588 = vpop.f32.mrf.mxu0
        %v589 = vadd.f32 0.0, %v588
        %590 = vmatmul.f32.gmra.mxu0 %v524
        %v591 = vpop.f32.mrf.mxu0
        %v592 = vadd.f32 0.0, %v591
        %593 = vmatmul.f32.gmra.mxu0 %v527
        %v594 = vpop.f32.mrf.mxu0
        %v595 = vadd.f32 0.0, %v594
        %596 = vdwg.mxu0
        %v597 = vadd.f32 %v416, %v550
        %v598 = vadd.f32 %v419, %v553
        %v599 = vadd.f32 %v422, %v556
        %v600 = vadd.f32 %v425, %v559
        %v601 = vadd.f32 %v428, %v562
        %v602 = vadd.f32 %v431, %v565
        %v603 = vadd.f32 %v434, %v568
        %v604 = vadd.f32 %v437, %v571
        %v605 = vadd.f32 %v440, %v574
        %v606 = vadd.f32 %v443, %v577
        %v607 = vadd.f32 %v446, %v580
        %v608 = vadd.f32 %v449, %v583
        %v609 = vadd.f32 %v452, %v586
        %v610 = vadd.f32 %v455, %v589
        %v611 = vadd.f32 %v458, %v592
        %v612 = vadd.f32 %v461, %v595
        %s613 = sadd.s32 %s191, 1
        %s614 = smul.u32 %s613, 24
        %s615 = scalar_lea.vmem %s153, %s614
        %v616 = vld [vmem:[%s615] sm:$0xff]
        %v617 = vld [vmem:[%s615 + $0x8] sm:$0xff]
        %v618 = vld [vmem:[%s615 + $0x18] sm:$0xff]
        %v619 = vld [vmem:[%s615 + $0x20] sm:$0xff]
        %v620 = vld [vmem:[%s615 + $0x30] sm:$0xff]
        %v621 = vld [vmem:[%s615 + $0x38] sm:$0xff]
        %v622 = vld [vmem:[%s615 + $0x48] sm:$0xff]
        %v623 = vld [vmem:[%s615 + $0x50] sm:$0xff]
        %v624 = vld [vmem:[%s615 + $0x60] sm:$0xff]
        %v625 = vld [vmem:[%s615 + $0x68] sm:$0xff]
        %v626 = vld [vmem:[%s615 + $0x78] sm:$0xff]
        %v627 = vld [vmem:[%s615 + $0x80] sm:$0xff]
        %v628 = vld [vmem:[%s615 + $0x90] sm:$0xff]
        %v629 = vld [vmem:[%s615 + $0x98] sm:$0xff]
        %v630 = vld [vmem:[%s615 + $0xa8] sm:$0xff]
        %v631 = vld [vmem:[%s615 + $0xb0] sm:$0xff]
        %s632 = scalar_lea.vmem %s1, 12
        %v633 = vld [vmem:[%s632] sm:$0xf]
        %v635 = vsel %vm229, %v616, 0
        %v638 = vsel %vm229, %v617, 0
        %v641 = vsel %vm229, %v618, 0
        %v644 = vsel %vm229, %v619, 0
        %v647 = vsel %vm229, %v620, 0
        %v650 = vsel %vm229, %v621, 0
        %v653 = vsel %vm229, %v622, 0
        %v656 = vsel %vm229, %v623, 0
        %v659 = vsel %vm229, %v624, 0
        %v662 = vsel %vm229, %v625, 0
        %v665 = vsel %vm229, %v626, 0
        %v668 = vsel %vm229, %v627, 0
        %v671 = vsel %vm229, %v628, 0
        %v674 = vsel %vm229, %v629, 0
        %v677 = vsel %vm229, %v630, 0
        %v680 = vsel %vm229, %v631, 0
        %v683 = vsel %vm278, %v633, 0
        %685 = vmatpush.msra.mxu0 0.0
        %686 = vmatpush.msra.mxu0 0.0
        %687 = vmatpush.msra.mxu0 0.0
        %688 = vmatpush.msra.mxu0 0.0
        %689 = vmatpush.msra.mxu0 0.0
        %690 = vmatpush.msra.mxu0 0.0
        %691 = vmatpush.msra.mxu0 0.0
        %692 = vmatpush.msra.mxu0 0.0
        %693 = vmatpush.msra.mxu0 0.0
        %694 = vmatpush.msra.mxu0 0.0
        %695 = vmatpush.msra.mxu0 0.0
        %696 = vmatpush.msra.mxu0 0.0
        %697 = vmatpush.msra.mxu0 0.0
        %698 = vmatpush.msra.mxu0 0.0
        %699 = vmatpush.msra.mxu0 0.0
        %700 = vmatpush.msra.mxu0 %v683
        %701 = vmatmul.f32.gmra.mxu0 %v635
        %v702 = vpop.f32.mrf.mxu0
        %v703 = vadd.f32 0.0, %v702
        %704 = vmatmul.f32.gmra.mxu0 %v638
        %v705 = vpop.f32.mrf.mxu0
        %v706 = vadd.f32 0.0, %v705
        %707 = vmatmul.f32.gmra.mxu0 %v641
        %v708 = vpop.f32.mrf.mxu0
        %v709 = vadd.f32 0.0, %v708
        %710 = vmatmul.f32.gmra.mxu0 %v644
        %v711 = vpop.f32.mrf.mxu0
        %v712 = vadd.f32 0.0, %v711
        %713 = vmatmul.f32.gmra.mxu0 %v647
        %v714 = vpop.f32.mrf.mxu0
        %v715 = vadd.f32 0.0, %v714
        %716 = vmatmul.f32.gmra.mxu0 %v650
        %v717 = vpop.f32.mrf.mxu0
        %v718 = vadd.f32 0.0, %v717
        %719 = vmatmul.f32.gmra.mxu0 %v653
        %v720 = vpop.f32.mrf.mxu0
        %v721 = vadd.f32 0.0, %v720
        %722 = vmatmul.f32.gmra.mxu0 %v656
        %v723 = vpop.f32.mrf.mxu0
        %v724 = vadd.f32 0.0, %v723
        %725 = vmatmul.f32.gmra.mxu0 %v659
        %v726 = vpop.f32.mrf.mxu0
        %v727 = vadd.f32 0.0, %v726
        %728 = vmatmul.f32.gmra.mxu0 %v662
        %v729 = vpop.f32.mrf.mxu0
        %v730 = vadd.f32 0.0, %v729
        %731 = vmatmul.f32.gmra.mxu0 %v665
        %v732 = vpop.f32.mrf.mxu0
        %v733 = vadd.f32 0.0, %v732
        %734 = vmatmul.f32.gmra.mxu0 %v668
        %v735 = vpop.f32.mrf.mxu0
        %v736 = vadd.f32 0.0, %v735
        %737 = vmatmul.f32.gmra.mxu0 %v671
        %v738 = vpop.f32.mrf.mxu0
        %v739 = vadd.f32 0.0, %v738
        %740 = vmatmul.f32.gmra.mxu0 %v674
        %v741 = vpop.f32.mrf.mxu0
        %v742 = vadd.f32 0.0, %v741
        %743 = vmatmul.f32.gmra.mxu0 %v677
        %v744 = vpop.f32.mrf.mxu0
        %v745 = vadd.f32 0.0, %v744
        %746 = vmatmul.f32.gmra.mxu0 %v680
        %v747 = vpop.f32.mrf.mxu0
        %v748 = vadd.f32 0.0, %v747
        %749 = vdwg.mxu0
        %v750 = vadd.f32 %v597, %v703
        %v751 = vadd.f32 %v598, %v706
        %v752 = vadd.f32 %v599, %v709
        %v753 = vadd.f32 %v600, %v712
        %v754 = vadd.f32 %v601, %v715
        %v755 = vadd.f32 %v602, %v718
        %v756 = vadd.f32 %v603, %v721
        %v757 = vadd.f32 %v604, %v724
        %v758 = vadd.f32 %v605, %v727
        %v759 = vadd.f32 %v606, %v730
        %v760 = vadd.f32 %v607, %v733
        %v761 = vadd.f32 %v608, %v736
        %v762 = vadd.f32 %v609, %v739
        %v763 = vadd.f32 %v610, %v742
        %v764 = vadd.f32 %v611, %v745
        %v765 = vadd.f32 %v612, %v748
        %v766 = vld [vmem:[%s615 + $0x1] sm:$0xff]
        %v767 = vld [vmem:[%s615 + $0x9] sm:$0xff]
        %v768 = vld [vmem:[%s615 + $0x19] sm:$0xff]
        %v769 = vld [vmem:[%s615 + $0x21] sm:$0xff]
        %v770 = vld [vmem:[%s615 + $0x31] sm:$0xff]
        %v771 = vld [vmem:[%s615 + $0x39] sm:$0xff]
        %v772 = vld [vmem:[%s615 + $0x49] sm:$0xff]
        %v773 = vld [vmem:[%s615 + $0x51] sm:$0xff]
        %v774 = vld [vmem:[%s615 + $0x61] sm:$0xff]
        %v775 = vld [vmem:[%s615 + $0x69] sm:$0xff]
        %v776 = vld [vmem:[%s615 + $0x79] sm:$0xff]
        %v777 = vld [vmem:[%s615 + $0x81] sm:$0xff]
        %v778 = vld [vmem:[%s615 + $0x91] sm:$0xff]
        %v779 = vld [vmem:[%s615 + $0x99] sm:$0xff]
        %v780 = vld [vmem:[%s615 + $0xa9] sm:$0xff]
        %v781 = vld [vmem:[%s615 + $0xb1] sm:$0xff]
        %s782 = scalar_lea.vmem %s1, 16
        %v783 = vld [vmem:[%s782] sm:$0xf]
        %v785 = vsel %vm229, %v766, 0
        %v788 = vsel %vm229, %v767, 0
        %v791 = vsel %vm229, %v768, 0
        %v794 = vsel %vm229, %v769, 0
        %v797 = vsel %vm229, %v770, 0
        %v800 = vsel %vm229, %v771, 0
        %v803 = vsel %vm229, %v772, 0
        %v806 = vsel %vm229, %v773, 0
        %v809 = vsel %vm229, %v774, 0
        %v812 = vsel %vm229, %v775, 0
        %v815 = vsel %vm229, %v776, 0
        %v818 = vsel %vm229, %v777, 0
        %v821 = vsel %vm229, %v778, 0
        %v824 = vsel %vm229, %v779, 0
        %v827 = vsel %vm229, %v780, 0
        %v830 = vsel %vm229, %v781, 0
        %v833 = vsel %vm278, %v783, 0
        %835 = vmatpush.msra.mxu0 0.0
        %836 = vmatpush.msra.mxu0 0.0
        %837 = vmatpush.msra.mxu0 0.0
        %838 = vmatpush.msra.mxu0 0.0
        %839 = vmatpush.msra.mxu0 0.0
        %840 = vmatpush.msra.mxu0 0.0
        %841 = vmatpush.msra.mxu0 0.0
        %842 = vmatpush.msra.mxu0 0.0
        %843 = vmatpush.msra.mxu0 0.0
        %844 = vmatpush.msra.mxu0 0.0
        %845 = vmatpush.msra.mxu0 0.0
        %846 = vmatpush.msra.mxu0 0.0
        %847 = vmatpush.msra.mxu0 0.0
        %848 = vmatpush.msra.mxu0 0.0
        %849 = vmatpush.msra.mxu0 0.0
        %850 = vmatpush.msra.mxu0 %v833
        %851 = vmatmul.f32.gmra.mxu0 %v785
        %v852 = vpop.f32.mrf.mxu0
        %v853 = vadd.f32 0.0, %v852
        %854 = vmatmul.f32.gmra.mxu0 %v788
        %v855 = vpop.f32.mrf.mxu0
        %v856 = vadd.f32 0.0, %v855
        %857 = vmatmul.f32.gmra.mxu0 %v791
        %v858 = vpop.f32.mrf.mxu0
        %v859 = vadd.f32 0.0, %v858
        %860 = vmatmul.f32.gmra.mxu0 %v794
        %v861 = vpop.f32.mrf.mxu0
        %v862 = vadd.f32 0.0, %v861
        %863 = vmatmul.f32.gmra.mxu0 %v797
        %v864 = vpop.f32.mrf.mxu0
        %v865 = vadd.f32 0.0, %v864
        %866 = vmatmul.f32.gmra.mxu0 %v800
        %v867 = vpop.f32.mrf.mxu0
        %v868 = vadd.f32 0.0, %v867
        %869 = vmatmul.f32.gmra.mxu0 %v803
        %v870 = vpop.f32.mrf.mxu0
        %v871 = vadd.f32 0.0, %v870
        %872 = vmatmul.f32.gmra.mxu0 %v806
        %v873 = vpop.f32.mrf.mxu0
        %v874 = vadd.f32 0.0, %v873
        %875 = vmatmul.f32.gmra.mxu0 %v809
        %v876 = vpop.f32.mrf.mxu0
        %v877 = vadd.f32 0.0, %v876
        %878 = vmatmul.f32.gmra.mxu0 %v812
        %v879 = vpop.f32.mrf.mxu0
        %v880 = vadd.f32 0.0, %v879
        %881 = vmatmul.f32.gmra.mxu0 %v815
        %v882 = vpop.f32.mrf.mxu0
        %v883 = vadd.f32 0.0, %v882
        %884 = vmatmul.f32.gmra.mxu0 %v818
        %v885 = vpop.f32.mrf.mxu0
        %v886 = vadd.f32 0.0, %v885
        %887 = vmatmul.f32.gmra.mxu0 %v821
        %v888 = vpop.f32.mrf.mxu0
        %v889 = vadd.f32 0.0, %v888
        %890 = vmatmul.f32.gmra.mxu0 %v824
        %v891 = vpop.f32.mrf.mxu0
        %v892 = vadd.f32 0.0, %v891
        %893 = vmatmul.f32.gmra.mxu0 %v827
        %v894 = vpop.f32.mrf.mxu0
        %v895 = vadd.f32 0.0, %v894
        %896 = vmatmul.f32.gmra.mxu0 %v830
        %v897 = vpop.f32.mrf.mxu0
        %v898 = vadd.f32 0.0, %v897
        %899 = vdwg.mxu0
        %v900 = vadd.f32 %v750, %v853
        %v901 = vadd.f32 %v751, %v856
        %v902 = vadd.f32 %v752, %v859
        %v903 = vadd.f32 %v753, %v862
        %v904 = vadd.f32 %v754, %v865
        %v905 = vadd.f32 %v755, %v868
        %v906 = vadd.f32 %v756, %v871
        %v907 = vadd.f32 %v757, %v874
        %v908 = vadd.f32 %v758, %v877
        %v909 = vadd.f32 %v759, %v880
        %v910 = vadd.f32 %v760, %v883
        %v911 = vadd.f32 %v761, %v886
        %v912 = vadd.f32 %v762, %v889
        %v913 = vadd.f32 %v763, %v892
        %v914 = vadd.f32 %v764, %v895
        %v915 = vadd.f32 %v765, %v898
        %v916 = vld [vmem:[%s615 + $0x2] sm:$0xff]
        %v917 = vld [vmem:[%s615 + $0xa] sm:$0xff]
        %v918 = vld [vmem:[%s615 + $0x1a] sm:$0xff]
        %v919 = vld [vmem:[%s615 + $0x22] sm:$0xff]
        %v920 = vld [vmem:[%s615 + $0x32] sm:$0xff]
        %v921 = vld [vmem:[%s615 + $0x3a] sm:$0xff]
        %v922 = vld [vmem:[%s615 + $0x4a] sm:$0xff]
        %v923 = vld [vmem:[%s615 + $0x52] sm:$0xff]
        %v924 = vld [vmem:[%s615 + $0x62] sm:$0xff]
        %v925 = vld [vmem:[%s615 + $0x6a] sm:$0xff]
        %v926 = vld [vmem:[%s615 + $0x7a] sm:$0xff]
        %v927 = vld [vmem:[%s615 + $0x82] sm:$0xff]
        %v928 = vld [vmem:[%s615 + $0x92] sm:$0xff]
        %v929 = vld [vmem:[%s615 + $0x9a] sm:$0xff]
        %v930 = vld [vmem:[%s615 + $0xaa] sm:$0xff]
        %v931 = vld [vmem:[%s615 + $0xb2] sm:$0xff]
        %s932 = scalar_lea.vmem %s1, 20
        %v933 = vld [vmem:[%s932] sm:$0xf]
        %v935 = vsel %vm229, %v916, 0
        %v938 = vsel %vm229, %v917, 0
        %v941 = vsel %vm229, %v918, 0
        %v944 = vsel %vm229, %v919, 0
        %v947 = vsel %vm229, %v920, 0
        %v950 = vsel %vm229, %v921, 0
        %v953 = vsel %vm229, %v922, 0
        %v956 = vsel %vm229, %v923, 0
        %v959 = vsel %vm229, %v924, 0
        %v962 = vsel %vm229, %v925, 0
        %v965 = vsel %vm229, %v926, 0
        %v968 = vsel %vm229, %v927, 0
        %v971 = vsel %vm229, %v928, 0
        %v974 = vsel %vm229, %v929, 0
        %v977 = vsel %vm229, %v930, 0
        %v980 = vsel %vm229, %v931, 0
        %v983 = vsel %vm278, %v933, 0
        %985 = vmatpush.msra.mxu0 0.0
        %986 = vmatpush.msra.mxu0 0.0
        %987 = vmatpush.msra.mxu0 0.0
        %988 = vmatpush.msra.mxu0 0.0
        %989 = vmatpush.msra.mxu0 0.0
        %990 = vmatpush.msra.mxu0 0.0
        %991 = vmatpush.msra.mxu0 0.0
        %992 = vmatpush.msra.mxu0 0.0
        %993 = vmatpush.msra.mxu0 0.0
        %994 = vmatpush.msra.mxu0 0.0
        %995 = vmatpush.msra.mxu0 0.0
        %996 = vmatpush.msra.mxu0 0.0
        %997 = vmatpush.msra.mxu0 0.0
        %998 = vmatpush.msra.mxu0 0.0
        %999 = vmatpush.msra.mxu0 0.0
        %1000 = vmatpush.msra.mxu0 %v983
        %1001 = vmatmul.f32.gmra.mxu0 %v935
        %v1002 = vpop.f32.mrf.mxu0
        %v1003 = vadd.f32 0.0, %v1002
        %1004 = vmatmul.f32.gmra.mxu0 %v938
        %v1005 = vpop.f32.mrf.mxu0
        %v1006 = vadd.f32 0.0, %v1005
        %1007 = vmatmul.f32.gmra.mxu0 %v941
        %v1008 = vpop.f32.mrf.mxu0
        %v1009 = vadd.f32 0.0, %v1008
        %1010 = vmatmul.f32.gmra.mxu0 %v944
        %v1011 = vpop.f32.mrf.mxu0
        %v1012 = vadd.f32 0.0, %v1011
        %1013 = vmatmul.f32.gmra.mxu0 %v947
        %v1014 = vpop.f32.mrf.mxu0
        %v1015 = vadd.f32 0.0, %v1014
        %1016 = vmatmul.f32.gmra.mxu0 %v950
        %v1017 = vpop.f32.mrf.mxu0
        %v1018 = vadd.f32 0.0, %v1017
        %1019 = vmatmul.f32.gmra.mxu0 %v953
        %v1020 = vpop.f32.mrf.mxu0
        %v1021 = vadd.f32 0.0, %v1020
        %1022 = vmatmul.f32.gmra.mxu0 %v956
        %v1023 = vpop.f32.mrf.mxu0
        %v1024 = vadd.f32 0.0, %v1023
        %1025 = vmatmul.f32.gmra.mxu0 %v959
        %v1026 = vpop.f32.mrf.mxu0
        %v1027 = vadd.f32 0.0, %v1026
        %1028 = vmatmul.f32.gmra.mxu0 %v962
        %v1029 = vpop.f32.mrf.mxu0
        %v1030 = vadd.f32 0.0, %v1029
        %1031 = vmatmul.f32.gmra.mxu0 %v965
        %v1032 = vpop.f32.mrf.mxu0
        %v1033 = vadd.f32 0.0, %v1032
        %1034 = vmatmul.f32.gmra.mxu0 %v968
        %v1035 = vpop.f32.mrf.mxu0
        %v1036 = vadd.f32 0.0, %v1035
        %1037 = vmatmul.f32.gmra.mxu0 %v971
        %v1038 = vpop.f32.mrf.mxu0
        %v1039 = vadd.f32 0.0, %v1038
        %1040 = vmatmul.f32.gmra.mxu0 %v974
        %v1041 = vpop.f32.mrf.mxu0
        %v1042 = vadd.f32 0.0, %v1041
        %1043 = vmatmul.f32.gmra.mxu0 %v977
        %v1044 = vpop.f32.mrf.mxu0
        %v1045 = vadd.f32 0.0, %v1044
        %1046 = vmatmul.f32.gmra.mxu0 %v980
        %v1047 = vpop.f32.mrf.mxu0
        %v1048 = vadd.f32 0.0, %v1047
        %1049 = vdwg.mxu0
        %v1050 = vadd.f32 %v900, %v1003
        %v1051 = vadd.f32 %v901, %v1006
        %v1052 = vadd.f32 %v902, %v1009
        %v1053 = vadd.f32 %v903, %v1012
        %v1054 = vadd.f32 %v904, %v1015
        %v1055 = vadd.f32 %v905, %v1018
        %v1056 = vadd.f32 %v906, %v1021
        %v1057 = vadd.f32 %v907, %v1024
        %v1058 = vadd.f32 %v908, %v1027
        %v1059 = vadd.f32 %v909, %v1030
        %v1060 = vadd.f32 %v910, %v1033
        %v1061 = vadd.f32 %v911, %v1036
        %v1062 = vadd.f32 %v912, %v1039
        %v1063 = vadd.f32 %v913, %v1042
        %v1064 = vadd.f32 %v914, %v1045
        %v1065 = vadd.f32 %v915, %v1048
        %s1066 = sadd.s32 %s191, 2
        %s1067 = smul.u32 %s1066, 24
        %s1068 = scalar_lea.vmem %s153, %s1067
        %v1069 = vld [vmem:[%s1068] sm:$0xff]
        %v1070 = vld [vmem:[%s1068 + $0x8] sm:$0xff]
        %v1071 = vld [vmem:[%s1068 + $0x18] sm:$0xff]
        %v1072 = vld [vmem:[%s1068 + $0x20] sm:$0xff]
        %v1073 = vld [vmem:[%s1068 + $0x30] sm:$0xff]
        %v1074 = vld [vmem:[%s1068 + $0x38] sm:$0xff]
        %v1075 = vld [vmem:[%s1068 + $0x48] sm:$0xff]
        %v1076 = vld [vmem:[%s1068 + $0x50] sm:$0xff]
        %v1077 = vld [vmem:[%s1068 + $0x60] sm:$0xff]
        %v1078 = vld [vmem:[%s1068 + $0x68] sm:$0xff]
        %v1079 = vld [vmem:[%s1068 + $0x78] sm:$0xff]
        %v1080 = vld [vmem:[%s1068 + $0x80] sm:$0xff]
        %v1081 = vld [vmem:[%s1068 + $0x90] sm:$0xff]
        %v1082 = vld [vmem:[%s1068 + $0x98] sm:$0xff]
        %v1083 = vld [vmem:[%s1068 + $0xa8] sm:$0xff]
        %v1084 = vld [vmem:[%s1068 + $0xb0] sm:$0xff]
        %s1085 = scalar_lea.vmem %s1, 24
        %v1086 = vld [vmem:[%s1085] sm:$0xf]
        %v1088 = vsel %vm229, %v1069, 0
        %v1091 = vsel %vm229, %v1070, 0
        %v1094 = vsel %vm229, %v1071, 0
        %v1097 = vsel %vm229, %v1072, 0
        %v1100 = vsel %vm229, %v1073, 0
        %v1103 = vsel %vm229, %v1074, 0
        %v1106 = vsel %vm229, %v1075, 0
        %v1109 = vsel %vm229, %v1076, 0
        %v1112 = vsel %vm229, %v1077, 0
        %v1115 = vsel %vm229, %v1078, 0
        %v1118 = vsel %vm229, %v1079, 0
        %v1121 = vsel %vm229, %v1080, 0
        %v1124 = vsel %vm229, %v1081, 0
        %v1127 = vsel %vm229, %v1082, 0
        %v1130 = vsel %vm229, %v1083, 0
        %v1133 = vsel %vm229, %v1084, 0
        %v1136 = vsel %vm278, %v1086, 0
        %1138 = vmatpush.msra.mxu0 0.0
        %1139 = vmatpush.msra.mxu0 0.0
        %1140 = vmatpush.msra.mxu0 0.0
        %1141 = vmatpush.msra.mxu0 0.0
        %1142 = vmatpush.msra.mxu0 0.0
        %1143 = vmatpush.msra.mxu0 0.0
        %1144 = vmatpush.msra.mxu0 0.0
        %1145 = vmatpush.msra.mxu0 0.0
        %1146 = vmatpush.msra.mxu0 0.0
        %1147 = vmatpush.msra.mxu0 0.0
        %1148 = vmatpush.msra.mxu0 0.0
        %1149 = vmatpush.msra.mxu0 0.0
        %1150 = vmatpush.msra.mxu0 0.0
        %1151 = vmatpush.msra.mxu0 0.0
        %1152 = vmatpush.msra.mxu0 0.0
        %1153 = vmatpush.msra.mxu0 %v1136
        %1154 = vmatmul.f32.gmra.mxu0 %v1088
        %v1155 = vpop.f32.mrf.mxu0
        %v1156 = vadd.f32 0.0, %v1155
        %1157 = vmatmul.f32.gmra.mxu0 %v1091
        %v1158 = vpop.f32.mrf.mxu0
        %v1159 = vadd.f32 0.0, %v1158
        %1160 = vmatmul.f32.gmra.mxu0 %v1094
        %v1161 = vpop.f32.mrf.mxu0
        %v1162 = vadd.f32 0.0, %v1161
        %1163 = vmatmul.f32.gmra.mxu0 %v1097
        %v1164 = vpop.f32.mrf.mxu0
        %v1165 = vadd.f32 0.0, %v1164
        %1166 = vmatmul.f32.gmra.mxu0 %v1100
        %v1167 = vpop.f32.mrf.mxu0
        %v1168 = vadd.f32 0.0, %v1167
        %1169 = vmatmul.f32.gmra.mxu0 %v1103
        %v1170 = vpop.f32.mrf.mxu0
        %v1171 = vadd.f32 0.0, %v1170
        %1172 = vmatmul.f32.gmra.mxu0 %v1106
        %v1173 = vpop.f32.mrf.mxu0
        %v1174 = vadd.f32 0.0, %v1173
        %1175 = vmatmul.f32.gmra.mxu0 %v1109
        %v1176 = vpop.f32.mrf.mxu0
        %v1177 = vadd.f32 0.0, %v1176
        %1178 = vmatmul.f32.gmra.mxu0 %v1112
        %v1179 = vpop.f32.mrf.mxu0
        %v1180 = vadd.f32 0.0, %v1179
        %1181 = vmatmul.f32.gmra.mxu0 %v1115
        %v1182 = vpop.f32.mrf.mxu0
        %v1183 = vadd.f32 0.0, %v1182
        %1184 = vmatmul.f32.gmra.mxu0 %v1118
        %v1185 = vpop.f32.mrf.mxu0
        %v1186 = vadd.f32 0.0, %v1185
        %1187 = vmatmul.f32.gmra.mxu0 %v1121
        %v1188 = vpop.f32.mrf.mxu0
        %v1189 = vadd.f32 0.0, %v1188
        %1190 = vmatmul.f32.gmra.mxu0 %v1124
        %v1191 = vpop.f32.mrf.mxu0
        %v1192 = vadd.f32 0.0, %v1191
        %1193 = vmatmul.f32.gmra.mxu0 %v1127
        %v1194 = vpop.f32.mrf.mxu0
        %v1195 = vadd.f32 0.0, %v1194
        %1196 = vmatmul.f32.gmra.mxu0 %v1130
        %v1197 = vpop.f32.mrf.mxu0
        %v1198 = vadd.f32 0.0, %v1197
        %1199 = vmatmul.f32.gmra.mxu0 %v1133
        %v1200 = vpop.f32.mrf.mxu0
        %v1201 = vadd.f32 0.0, %v1200
        %1202 = vdwg.mxu0
        %v1203 = vadd.f32 %v1050, %v1156
        %v1204 = vadd.f32 %v1051, %v1159
        %v1205 = vadd.f32 %v1052, %v1162
        %v1206 = vadd.f32 %v1053, %v1165
        %v1207 = vadd.f32 %v1054, %v1168
        %v1208 = vadd.f32 %v1055, %v1171
        %v1209 = vadd.f32 %v1056, %v1174
        %v1210 = vadd.f32 %v1057, %v1177
        %v1211 = vadd.f32 %v1058, %v1180
        %v1212 = vadd.f32 %v1059, %v1183
        %v1213 = vadd.f32 %v1060, %v1186
        %v1214 = vadd.f32 %v1061, %v1189
        %v1215 = vadd.f32 %v1062, %v1192
        %v1216 = vadd.f32 %v1063, %v1195
        %v1217 = vadd.f32 %v1064, %v1198
        %v1218 = vadd.f32 %v1065, %v1201
        %v1219 = vld [vmem:[%s1068 + $0x1] sm:$0xff]
        %v1220 = vld [vmem:[%s1068 + $0x9] sm:$0xff]
        %v1221 = vld [vmem:[%s1068 + $0x19] sm:$0xff]
        %v1222 = vld [vmem:[%s1068 + $0x21] sm:$0xff]
        %v1223 = vld [vmem:[%s1068 + $0x31] sm:$0xff]
        %v1224 = vld [vmem:[%s1068 + $0x39] sm:$0xff]
        %v1225 = vld [vmem:[%s1068 + $0x49] sm:$0xff]
        %v1226 = vld [vmem:[%s1068 + $0x51] sm:$0xff]
        %v1227 = vld [vmem:[%s1068 + $0x61] sm:$0xff]
        %v1228 = vld [vmem:[%s1068 + $0x69] sm:$0xff]
        %v1229 = vld [vmem:[%s1068 + $0x79] sm:$0xff]
        %v1230 = vld [vmem:[%s1068 + $0x81] sm:$0xff]
        %v1231 = vld [vmem:[%s1068 + $0x91] sm:$0xff]
        %v1232 = vld [vmem:[%s1068 + $0x99] sm:$0xff]
        %v1233 = vld [vmem:[%s1068 + $0xa9] sm:$0xff]
        %v1234 = vld [vmem:[%s1068 + $0xb1] sm:$0xff]
        %s1235 = scalar_lea.vmem %s1, 28
        %v1236 = vld [vmem:[%s1235] sm:$0xf]
        %v1238 = vsel %vm229, %v1219, 0
        %v1241 = vsel %vm229, %v1220, 0
        %v1244 = vsel %vm229, %v1221, 0
        %v1247 = vsel %vm229, %v1222, 0
        %v1250 = vsel %vm229, %v1223, 0
        %v1253 = vsel %vm229, %v1224, 0
        %v1256 = vsel %vm229, %v1225, 0
        %v1259 = vsel %vm229, %v1226, 0
        %v1262 = vsel %vm229, %v1227, 0
        %v1265 = vsel %vm229, %v1228, 0
        %v1268 = vsel %vm229, %v1229, 0
        %v1271 = vsel %vm229, %v1230, 0
        %v1274 = vsel %vm229, %v1231, 0
        %v1277 = vsel %vm229, %v1232, 0
        %v1280 = vsel %vm229, %v1233, 0
        %v1283 = vsel %vm229, %v1234, 0
        %v1286 = vsel %vm278, %v1236, 0
        %1288 = vmatpush.msra.mxu0 0.0
        %1289 = vmatpush.msra.mxu0 0.0
        %1290 = vmatpush.msra.mxu0 0.0
        %1291 = vmatpush.msra.mxu0 0.0
        %1292 = vmatpush.msra.mxu0 0.0
        %1293 = vmatpush.msra.mxu0 0.0
        %1294 = vmatpush.msra.mxu0 0.0
        %1295 = vmatpush.msra.mxu0 0.0
        %1296 = vmatpush.msra.mxu0 0.0
        %1297 = vmatpush.msra.mxu0 0.0
        %1298 = vmatpush.msra.mxu0 0.0
        %1299 = vmatpush.msra.mxu0 0.0
        %1300 = vmatpush.msra.mxu0 0.0
        %1301 = vmatpush.msra.mxu0 0.0
        %1302 = vmatpush.msra.mxu0 0.0
        %1303 = vmatpush.msra.mxu0 %v1286
        %1304 = vmatmul.f32.gmra.mxu0 %v1238
        %v1305 = vpop.f32.mrf.mxu0
        %v1306 = vadd.f32 0.0, %v1305
        %1307 = vmatmul.f32.gmra.mxu0 %v1241
        %v1308 = vpop.f32.mrf.mxu0
        %v1309 = vadd.f32 0.0, %v1308
        %1310 = vmatmul.f32.gmra.mxu0 %v1244
        %v1311 = vpop.f32.mrf.mxu0
        %v1312 = vadd.f32 0.0, %v1311
        %1313 = vmatmul.f32.gmra.mxu0 %v1247
        %v1314 = vpop.f32.mrf.mxu0
        %v1315 = vadd.f32 0.0, %v1314
        %1316 = vmatmul.f32.gmra.mxu0 %v1250
        %v1317 = vpop.f32.mrf.mxu0
        %v1318 = vadd.f32 0.0, %v1317
        %1319 = vmatmul.f32.gmra.mxu0 %v1253
        %v1320 = vpop.f32.mrf.mxu0
        %v1321 = vadd.f32 0.0, %v1320
        %1322 = vmatmul.f32.gmra.mxu0 %v1256
        %v1323 = vpop.f32.mrf.mxu0
        %v1324 = vadd.f32 0.0, %v1323
        %1325 = vmatmul.f32.gmra.mxu0 %v1259
        %v1326 = vpop.f32.mrf.mxu0
        %v1327 = vadd.f32 0.0, %v1326
        %1328 = vmatmul.f32.gmra.mxu0 %v1262
        %v1329 = vpop.f32.mrf.mxu0
        %v1330 = vadd.f32 0.0, %v1329
        %1331 = vmatmul.f32.gmra.mxu0 %v1265
        %v1332 = vpop.f32.mrf.mxu0
        %v1333 = vadd.f32 0.0, %v1332
        %1334 = vmatmul.f32.gmra.mxu0 %v1268
        %v1335 = vpop.f32.mrf.mxu0
        %v1336 = vadd.f32 0.0, %v1335
        %1337 = vmatmul.f32.gmra.mxu0 %v1271
        %v1338 = vpop.f32.mrf.mxu0
        %v1339 = vadd.f32 0.0, %v1338
        %1340 = vmatmul.f32.gmra.mxu0 %v1274
        %v1341 = vpop.f32.mrf.mxu0
        %v1342 = vadd.f32 0.0, %v1341
        %1343 = vmatmul.f32.gmra.mxu0 %v1277
        %v1344 = vpop.f32.mrf.mxu0
        %v1345 = vadd.f32 0.0, %v1344
        %1346 = vmatmul.f32.gmra.mxu0 %v1280
        %v1347 = vpop.f32.mrf.mxu0
        %v1348 = vadd.f32 0.0, %v1347
        %1349 = vmatmul.f32.gmra.mxu0 %v1283
        %v1350 = vpop.f32.mrf.mxu0
        %v1351 = vadd.f32 0.0, %v1350
        %1352 = vdwg.mxu0
        %v1353 = vadd.f32 %v1203, %v1306
        %v1354 = vadd.f32 %v1204, %v1309
        %v1355 = vadd.f32 %v1205, %v1312
        %v1356 = vadd.f32 %v1206, %v1315
        %v1357 = vadd.f32 %v1207, %v1318
        %v1358 = vadd.f32 %v1208, %v1321
        %v1359 = vadd.f32 %v1209, %v1324
        %v1360 = vadd.f32 %v1210, %v1327
        %v1361 = vadd.f32 %v1211, %v1330
        %v1362 = vadd.f32 %v1212, %v1333
        %v1363 = vadd.f32 %v1213, %v1336
        %v1364 = vadd.f32 %v1214, %v1339
        %v1365 = vadd.f32 %v1215, %v1342
        %v1366 = vadd.f32 %v1216, %v1345
        %v1367 = vadd.f32 %v1217, %v1348
        %v1368 = vadd.f32 %v1218, %v1351
        %v1369 = vld [vmem:[%s1068 + $0x2] sm:$0xff]
        %v1370 = vld [vmem:[%s1068 + $0xa] sm:$0xff]
        %v1371 = vld [vmem:[%s1068 + $0x1a] sm:$0xff]
        %v1372 = vld [vmem:[%s1068 + $0x22] sm:$0xff]
        %v1373 = vld [vmem:[%s1068 + $0x32] sm:$0xff]
        %v1374 = vld [vmem:[%s1068 + $0x3a] sm:$0xff]
        %v1375 = vld [vmem:[%s1068 + $0x4a] sm:$0xff]
        %v1376 = vld [vmem:[%s1068 + $0x52] sm:$0xff]
        %v1377 = vld [vmem:[%s1068 + $0x62] sm:$0xff]
        %v1378 = vld [vmem:[%s1068 + $0x6a] sm:$0xff]
        %v1379 = vld [vmem:[%s1068 + $0x7a] sm:$0xff]
        %v1380 = vld [vmem:[%s1068 + $0x82] sm:$0xff]
        %v1381 = vld [vmem:[%s1068 + $0x92] sm:$0xff]
        %v1382 = vld [vmem:[%s1068 + $0x9a] sm:$0xff]
        %v1383 = vld [vmem:[%s1068 + $0xaa] sm:$0xff]
        %v1384 = vld [vmem:[%s1068 + $0xb2] sm:$0xff]
        %s1385 = scalar_lea.vmem %s1, 32
        %v1386 = vld [vmem:[%s1385] sm:$0xf]
        %v1388 = vsel %vm229, %v1369, 0
        %v1391 = vsel %vm229, %v1370, 0
        %v1394 = vsel %vm229, %v1371, 0
        %v1397 = vsel %vm229, %v1372, 0
        %v1400 = vsel %vm229, %v1373, 0
        %v1403 = vsel %vm229, %v1374, 0
        %v1406 = vsel %vm229, %v1375, 0
        %v1409 = vsel %vm229, %v1376, 0
        %v1412 = vsel %vm229, %v1377, 0
        %v1415 = vsel %vm229, %v1378, 0
        %v1418 = vsel %vm229, %v1379, 0
        %v1421 = vsel %vm229, %v1380, 0
        %v1424 = vsel %vm229, %v1381, 0
        %v1427 = vsel %vm229, %v1382, 0
        %v1430 = vsel %vm229, %v1383, 0
        %v1433 = vsel %vm229, %v1384, 0
        %v1436 = vsel %vm278, %v1386, 0
        %1438 = vmatpush.msra.mxu0 0.0
        %1439 = vmatpush.msra.mxu0 0.0
        %1440 = vmatpush.msra.mxu0 0.0
        %1441 = vmatpush.msra.mxu0 0.0
        %1442 = vmatpush.msra.mxu0 0.0
        %1443 = vmatpush.msra.mxu0 0.0
        %1444 = vmatpush.msra.mxu0 0.0
        %1445 = vmatpush.msra.mxu0 0.0
        %1446 = vmatpush.msra.mxu0 0.0
        %1447 = vmatpush.msra.mxu0 0.0
        %1448 = vmatpush.msra.mxu0 0.0
        %1449 = vmatpush.msra.mxu0 0.0
        %1450 = vmatpush.msra.mxu0 0.0
        %1451 = vmatpush.msra.mxu0 0.0
        %1452 = vmatpush.msra.mxu0 0.0
        %1453 = vmatpush.msra.mxu0 %v1436
        %1454 = vmatmul.f32.gmra.mxu0 %v1388
        %v1455 = vpop.f32.mrf.mxu0
        %v1456 = vadd.f32 0.0, %v1455
        %1457 = vmatmul.f32.gmra.mxu0 %v1391
        %v1458 = vpop.f32.mrf.mxu0
        %v1459 = vadd.f32 0.0, %v1458
        %1460 = vmatmul.f32.gmra.mxu0 %v1394
        %v1461 = vpop.f32.mrf.mxu0
        %v1462 = vadd.f32 0.0, %v1461
        %1463 = vmatmul.f32.gmra.mxu0 %v1397
        %v1464 = vpop.f32.mrf.mxu0
        %v1465 = vadd.f32 0.0, %v1464
        %1466 = vmatmul.f32.gmra.mxu0 %v1400
        %v1467 = vpop.f32.mrf.mxu0
        %v1468 = vadd.f32 0.0, %v1467
        %1469 = vmatmul.f32.gmra.mxu0 %v1403
        %v1470 = vpop.f32.mrf.mxu0
        %v1471 = vadd.f32 0.0, %v1470
        %1472 = vmatmul.f32.gmra.mxu0 %v1406
        %v1473 = vpop.f32.mrf.mxu0
        %v1474 = vadd.f32 0.0, %v1473
        %1475 = vmatmul.f32.gmra.mxu0 %v1409
        %v1476 = vpop.f32.mrf.mxu0
        %v1477 = vadd.f32 0.0, %v1476
        %1478 = vmatmul.f32.gmra.mxu0 %v1412
        %v1479 = vpop.f32.mrf.mxu0
        %v1480 = vadd.f32 0.0, %v1479
        %1481 = vmatmul.f32.gmra.mxu0 %v1415
        %v1482 = vpop.f32.mrf.mxu0
        %v1483 = vadd.f32 0.0, %v1482
        %1484 = vmatmul.f32.gmra.mxu0 %v1418
        %v1485 = vpop.f32.mrf.mxu0
        %v1486 = vadd.f32 0.0, %v1485
        %1487 = vmatmul.f32.gmra.mxu0 %v1421
        %v1488 = vpop.f32.mrf.mxu0
        %v1489 = vadd.f32 0.0, %v1488
        %1490 = vmatmul.f32.gmra.mxu0 %v1424
        %v1491 = vpop.f32.mrf.mxu0
        %v1492 = vadd.f32 0.0, %v1491
        %1493 = vmatmul.f32.gmra.mxu0 %v1427
        %v1494 = vpop.f32.mrf.mxu0
        %v1495 = vadd.f32 0.0, %v1494
        %1496 = vmatmul.f32.gmra.mxu0 %v1430
        %v1497 = vpop.f32.mrf.mxu0
        %v1498 = vadd.f32 0.0, %v1497
        %1499 = vmatmul.f32.gmra.mxu0 %v1433
        %v1500 = vpop.f32.mrf.mxu0
        %v1501 = vadd.f32 0.0, %v1500
        %1502 = vdwg.mxu0
        %v1503 = vadd.f32 %v1353, %v1456
        %v1504 = vadd.f32 %v1354, %v1459
        %v1505 = vadd.f32 %v1355, %v1462
        %v1506 = vadd.f32 %v1356, %v1465
        %v1507 = vadd.f32 %v1357, %v1468
        %v1508 = vadd.f32 %v1358, %v1471
        %v1509 = vadd.f32 %v1359, %v1474
        %v1510 = vadd.f32 %v1360, %v1477
        %v1511 = vadd.f32 %v1361, %v1480
        %v1512 = vadd.f32 %v1362, %v1483
        %v1513 = vadd.f32 %v1363, %v1486
        %v1514 = vadd.f32 %v1364, %v1489
        %v1515 = vadd.f32 %v1365, %v1492
        %v1516 = vadd.f32 %v1366, %v1495
        %v1517 = vadd.f32 %v1367, %v1498
        %v1518 = vadd.f32 %v1368, %v1501
        %1519 = vxpose.xlu0.b32.start [1/16] %v1503, 128
        %1520 = vxpose.xlu0.b32.cont [2/16] %v1504, 128
        %1521 = vxpose.xlu0.b32.cont [3/16] %v1505, 128
        %1522 = vxpose.xlu0.b32.cont [4/16] %v1506, 128
        %1523 = vxpose.xlu0.b32.cont [5/16] %v1507, 128
        %1524 = vxpose.xlu0.b32.cont [6/16] %v1508, 128
        %1525 = vxpose.xlu0.b32.cont [7/16] %v1509, 128
        %1526 = vxpose.xlu0.b32.cont [8/16] %v1510, 128
        %1527 = vxpose.xlu0.b32.cont [9/16] %v1511, 128
        %1528 = vxpose.xlu0.b32.cont [10/16] %v1512, 128
        %1529 = vxpose.xlu0.b32.cont [11/16] %v1513, 128
        %1530 = vxpose.xlu0.b32.cont [12/16] %v1514, 128
        %1531 = vxpose.xlu0.b32.cont [13/16] %v1515, 128
        %1532 = vxpose.xlu0.b32.cont [14/16] %v1516, 128
        %1533 = vxpose.xlu0.b32.cont [15/16] %v1517, 128
        %1534 = vxpose.xlu0.b32.end [16/16] %v1518, 128
        %v1535 = vpop.trf.xlu0
        %v1536 = vpop.trf.xlu0
        %v1537 = vpop.trf.xlu0
        %v1538 = vpop.trf.xlu0
        %v1539 = vpop.trf.xlu0
        %v1540 = vpop.trf.xlu0
        %v1541 = vpop.trf.xlu0
        %v1542 = vpop.trf.xlu0
        %v1543 = vpop.trf.xlu0
        %v1544 = vpop.trf.xlu0
        %v1545 = vpop.trf.xlu0
        %v1546 = vpop.trf.xlu0
        %v1547 = vpop.trf.xlu0
        %v1548 = vpop.trf.xlu0
        %v1549 = vpop.trf.xlu0
        %v1550 = vpop.trf.xlu0
        %v1551 = vld [vmem:[#allocation2] sm:$0xff]
        %v1552 = vld [vmem:[#allocation2 + $0x8] sm:$0xff]
        %v1553 = vld [vmem:[#allocation2 + $0x10] sm:$0xff]
        %v1554 = vld [vmem:[#allocation2 + $0x18] sm:$0xff]
        %v1555 = vld [vmem:[#allocation2 + $0x20] sm:$0xff]
        %v1556 = vld [vmem:[#allocation2 + $0x28] sm:$0xff]
        %v1557 = vld [vmem:[#allocation2 + $0x30] sm:$0xff]
        %v1558 = vld [vmem:[#allocation2 + $0x38] sm:$0xff]
        %v1559 = vld [vmem:[#allocation2 + $0x40] sm:$0xff]
        %v1560 = vld [vmem:[#allocation2 + $0x48] sm:$0xff]
        %v1561 = vld [vmem:[#allocation2 + $0x50] sm:$0xff]
        %v1562 = vld [vmem:[#allocation2 + $0x58] sm:$0xff]
        %v1563 = vld [vmem:[#allocation2 + $0x60] sm:$0xff]
        %v1564 = vld [vmem:[#allocation2 + $0x68] sm:$0xff]
        %v1565 = vld [vmem:[#allocation2 + $0x70] sm:$0xff]
        %v1566 = vld [vmem:[#allocation2 + $0x78] sm:$0xff]
        %1567 = vadd.xlane.f32.xlu0 %v1535
        %v1568 = vpop.xlane.xlu0 %1567
        %1569 = vadd.xlane.f32.xlu0 %v1536
        %v1570 = vpop.xlane.xlu0 %1569
        %1571 = vadd.xlane.f32.xlu0 %v1537
        %v1572 = vpop.xlane.xlu0 %1571
        %1573 = vadd.xlane.f32.xlu0 %v1538
        %v1574 = vpop.xlane.xlu0 %1573
        %1575 = vadd.xlane.f32.xlu0 %v1539
        %v1576 = vpop.xlane.xlu0 %1575
        %1577 = vadd.xlane.f32.xlu0 %v1540
        %v1578 = vpop.xlane.xlu0 %1577
        %1579 = vadd.xlane.f32.xlu0 %v1541
        %v1580 = vpop.xlane.xlu0 %1579
        %1581 = vadd.xlane.f32.xlu0 %v1542
        %v1582 = vpop.xlane.xlu0 %1581
        %1583 = vadd.xlane.f32.xlu0 %v1543
        %v1584 = vpop.xlane.xlu0 %1583
        %1585 = vadd.xlane.f32.xlu0 %v1544
        %v1586 = vpop.xlane.xlu0 %1585
        %1587 = vadd.xlane.f32.xlu0 %v1545
        %v1588 = vpop.xlane.xlu0 %1587
        %1589 = vadd.xlane.f32.xlu0 %v1546
        %v1590 = vpop.xlane.xlu0 %1589
        %1591 = vadd.xlane.f32.xlu0 %v1547
        %v1592 = vpop.xlane.xlu0 %1591
        %1593 = vadd.xlane.f32.xlu0 %v1548
        %v1594 = vpop.xlane.xlu0 %1593
        %1595 = vadd.xlane.f32.xlu0 %v1549
        %v1596 = vpop.xlane.xlu0 %1595
        %1597 = vadd.xlane.f32.xlu0 %v1550
        %v1598 = vpop.xlane.xlu0 %1597
        %v1599 = vadd.f32 %v1551, %v1568
        %v1600 = vadd.f32 %v1552, %v1570
        %v1601 = vadd.f32 %v1553, %v1572
        %v1602 = vadd.f32 %v1554, %v1574
        %v1603 = vadd.f32 %v1555, %v1576
        %v1604 = vadd.f32 %v1556, %v1578
        %v1605 = vadd.f32 %v1557, %v1580
        %v1606 = vadd.f32 %v1558, %v1582
        %v1607 = vadd.f32 %v1559, %v1584
        %v1608 = vadd.f32 %v1560, %v1586
        %v1609 = vadd.f32 %v1561, %v1588
        %v1610 = vadd.f32 %v1562, %v1590
        %v1611 = vadd.f32 %v1563, %v1592
        %v1612 = vadd.f32 %v1564, %v1594
        %v1613 = vadd.f32 %v1565, %v1596
        %v1614 = vadd.f32 %v1566, %v1598
        %vm1615 = vcmask 7168
        %1616 = vst.msk [vmem:[#allocation2] sm:$0xff] %vm1615, %v1599
        %1617 = vst.msk [vmem:[#allocation2 + $0x8] sm:$0xff] %vm1615, %v1600
        %1618 = vst.msk [vmem:[#allocation2 + $0x10] sm:$0xff] %vm1615, %v1601
        %1619 = vst.msk [vmem:[#allocation2 + $0x18] sm:$0xff] %vm1615, %v1602
        %1620 = vst.msk [vmem:[#allocation2 + $0x20] sm:$0xff] %vm1615, %v1603
        %1621 = vst.msk [vmem:[#allocation2 + $0x28] sm:$0xff] %vm1615, %v1604
        %1622 = vst.msk [vmem:[#allocation2 + $0x30] sm:$0xff] %vm1615, %v1605
        %1623 = vst.msk [vmem:[#allocation2 + $0x38] sm:$0xff] %vm1615, %v1606
        %1624 = vst.msk [vmem:[#allocation2 + $0x40] sm:$0xff] %vm1615, %v1607
        %1625 = vst.msk [vmem:[#allocation2 + $0x48] sm:$0xff] %vm1615, %v1608
        %1626 = vst.msk [vmem:[#allocation2 + $0x50] sm:$0xff] %vm1615, %v1609
        %1627 = vst.msk [vmem:[#allocation2 + $0x58] sm:$0xff] %vm1615, %v1610
        %1628 = vst.msk [vmem:[#allocation2 + $0x60] sm:$0xff] %vm1615, %v1611
        %1629 = vst.msk [vmem:[#allocation2 + $0x68] sm:$0xff] %vm1615, %v1612
        %1630 = vst.msk [vmem:[#allocation2 + $0x70] sm:$0xff] %vm1615, %v1613
        %1631 = vst.msk [vmem:[#allocation2 + $0x78] sm:$0xff] %vm1615, %v1614
        %v1632 = vld [vmem:[#allocation3] sm:$0xff]
        %v1633 = vld [vmem:[#allocation3 + $0x8] sm:$0xff]
        %v1634 = vld [vmem:[#allocation3 + $0x10] sm:$0xff]
        %v1635 = vld [vmem:[#allocation3 + $0x18] sm:$0xff]
        %v1636 = vld [vmem:[#allocation3 + $0x20] sm:$0xff]
        %v1637 = vld [vmem:[#allocation3 + $0x28] sm:$0xff]
        %v1638 = vld [vmem:[#allocation3 + $0x30] sm:$0xff]
        %v1639 = vld [vmem:[#allocation3 + $0x38] sm:$0xff]
        %v1640 = vld [vmem:[#allocation3 + $0x40] sm:$0xff]
        %v1641 = vld [vmem:[#allocation3 + $0x48] sm:$0xff]
        %v1642 = vld [vmem:[#allocation3 + $0x50] sm:$0xff]
        %v1643 = vld [vmem:[#allocation3 + $0x58] sm:$0xff]
        %v1644 = vld [vmem:[#allocation3 + $0x60] sm:$0xff]
        %v1645 = vld [vmem:[#allocation3 + $0x68] sm:$0xff]
        %v1646 = vld [vmem:[#allocation3 + $0x70] sm:$0xff]
        %v1647 = vld [vmem:[#allocation3 + $0x78] sm:$0xff]
        %v1648 = vmul.f32 %v1535, %v1535
        %v1649 = vmul.f32 %v1536, %v1536
        %v1650 = vmul.f32 %v1537, %v1537
        %v1651 = vmul.f32 %v1538, %v1538
        %v1652 = vmul.f32 %v1539, %v1539
        %v1653 = vmul.f32 %v1540, %v1540
        %v1654 = vmul.f32 %v1541, %v1541
        %v1655 = vmul.f32 %v1542, %v1542
        %v1656 = vmul.f32 %v1543, %v1543
        %v1657 = vmul.f32 %v1544, %v1544
        %v1658 = vmul.f32 %v1545, %v1545
        %v1659 = vmul.f32 %v1546, %v1546
        %v1660 = vmul.f32 %v1547, %v1547
        %v1661 = vmul.f32 %v1548, %v1548
        %v1662 = vmul.f32 %v1549, %v1549
        %v1663 = vmul.f32 %v1550, %v1550
        %1664 = vadd.xlane.f32.xlu0 %v1648
        %v1665 = vpop.xlane.xlu0 %1664
        %1666 = vadd.xlane.f32.xlu0 %v1649
        %v1667 = vpop.xlane.xlu0 %1666
        %1668 = vadd.xlane.f32.xlu0 %v1650
        %v1669 = vpop.xlane.xlu0 %1668
        %1670 = vadd.xlane.f32.xlu0 %v1651
        %v1671 = vpop.xlane.xlu0 %1670
        %1672 = vadd.xlane.f32.xlu0 %v1652
        %v1673 = vpop.xlane.xlu0 %1672
        %1674 = vadd.xlane.f32.xlu0 %v1653
        %v1675 = vpop.xlane.xlu0 %1674
        %1676 = vadd.xlane.f32.xlu0 %v1654
        %v1677 = vpop.xlane.xlu0 %1676
        %1678 = vadd.xlane.f32.xlu0 %v1655
        %v1679 = vpop.xlane.xlu0 %1678
        %1680 = vadd.xlane.f32.xlu0 %v1656
        %v1681 = vpop.xlane.xlu0 %1680
        %1682 = vadd.xlane.f32.xlu0 %v1657
        %v1683 = vpop.xlane.xlu0 %1682
        %1684 = vadd.xlane.f32.xlu0 %v1658
        %v1685 = vpop.xlane.xlu0 %1684
        %1686 = vadd.xlane.f32.xlu0 %v1659
        %v1687 = vpop.xlane.xlu0 %1686
        %1688 = vadd.xlane.f32.xlu0 %v1660
        %v1689 = vpop.xlane.xlu0 %1688
        %1690 = vadd.xlane.f32.xlu0 %v1661
        %v1691 = vpop.xlane.xlu0 %1690
        %1692 = vadd.xlane.f32.xlu0 %v1662
        %v1693 = vpop.xlane.xlu0 %1692
        %1694 = vadd.xlane.f32.xlu0 %v1663
        %v1695 = vpop.xlane.xlu0 %1694
        %v1696 = vadd.f32 %v1632, %v1665
        %v1697 = vadd.f32 %v1633, %v1667
        %v1698 = vadd.f32 %v1634, %v1669
        %v1699 = vadd.f32 %v1635, %v1671
        %v1700 = vadd.f32 %v1636, %v1673
        %v1701 = vadd.f32 %v1637, %v1675
        %v1702 = vadd.f32 %v1638, %v1677
        %v1703 = vadd.f32 %v1639, %v1679
        %v1704 = vadd.f32 %v1640, %v1681
        %v1705 = vadd.f32 %v1641, %v1683
        %v1706 = vadd.f32 %v1642, %v1685
        %v1707 = vadd.f32 %v1643, %v1687
        %v1708 = vadd.f32 %v1644, %v1689
        %v1709 = vadd.f32 %v1645, %v1691
        %v1710 = vadd.f32 %v1646, %v1693
        %v1711 = vadd.f32 %v1647, %v1695
        %1712 = vst.msk [vmem:[#allocation3] sm:$0xff] %vm1615, %v1696
        %1713 = vst.msk [vmem:[#allocation3 + $0x8] sm:$0xff] %vm1615, %v1697
        %1714 = vst.msk [vmem:[#allocation3 + $0x10] sm:$0xff] %vm1615, %v1698
        %1715 = vst.msk [vmem:[#allocation3 + $0x18] sm:$0xff] %vm1615, %v1699
        %1716 = vst.msk [vmem:[#allocation3 + $0x20] sm:$0xff] %vm1615, %v1700
        %1717 = vst.msk [vmem:[#allocation3 + $0x28] sm:$0xff] %vm1615, %v1701
        %1718 = vst.msk [vmem:[#allocation3 + $0x30] sm:$0xff] %vm1615, %v1702
        %1719 = vst.msk [vmem:[#allocation3 + $0x38] sm:$0xff] %vm1615, %v1703
        %1720 = vst.msk [vmem:[#allocation3 + $0x40] sm:$0xff] %vm1615, %v1704
        %1721 = vst.msk [vmem:[#allocation3 + $0x48] sm:$0xff] %vm1615, %v1705
        %1722 = vst.msk [vmem:[#allocation3 + $0x50] sm:$0xff] %vm1615, %v1706
        %1723 = vst.msk [vmem:[#allocation3 + $0x58] sm:$0xff] %vm1615, %v1707
        %1724 = vst.msk [vmem:[#allocation3 + $0x60] sm:$0xff] %vm1615, %v1708
        %1725 = vst.msk [vmem:[#allocation3 + $0x68] sm:$0xff] %vm1615, %v1709
        %1726 = vst.msk [vmem:[#allocation3 + $0x70] sm:$0xff] %vm1615, %v1710
        %1727 = vst.msk [vmem:[#allocation3 + $0x78] sm:$0xff] %vm1615, %v1711
        %s1728 = smul.u32 %s21, 128
        %s1729 = sshra.s32 %s1728, 7
        %s1730 = sand.u32 %s1728, 127
        %s1731 = smul.addr %s1729, 8
        %s1732 = scalar_lea.vmem %s148, %s1731 [#allocation4]
        %1733 = vst [vmem:[%s1732] sm:$0xff] %v1535
        %1734 = vst [vmem:[%s1732 + $0x10] sm:$0xff] %v1536
        %1735 = vst [vmem:[%s1732 + $0x20] sm:$0xff] %v1537
        %1736 = vst [vmem:[%s1732 + $0x30] sm:$0xff] %v1538
        %1737 = vst [vmem:[%s1732 + $0x40] sm:$0xff] %v1539
        %1738 = vst [vmem:[%s1732 + $0x50] sm:$0xff] %v1540
        %1739 = vst [vmem:[%s1732 + $0x60] sm:$0xff] %v1541
        %1740 = vst [vmem:[%s1732 + $0x70] sm:$0xff] %v1542
        %1741 = vst [vmem:[%s1732 + $0x80] sm:$0xff] %v1543
        %1742 = vst [vmem:[%s1732 + $0x90] sm:$0xff] %v1544
        %1743 = vst [vmem:[%s1732 + $0xa0] sm:$0xff] %v1545
        %1744 = vst [vmem:[%s1732 + $0xb0] sm:$0xff] %v1546
        %1745 = vst [vmem:[%s1732 + $0xc0] sm:$0xff] %v1547
        %1746 = vst [vmem:[%s1732 + $0xd0] sm:$0xff] %v1548
        %1747 = vst [vmem:[%s1732 + $0xe0] sm:$0xff] %v1549
        %1748 = vst [vmem:[%s1732 + $0xf0] sm:$0xff] %v1550
        %p1749 = scmp.eq.s32.totalorder %s21, 1
        // Predicated region
        $region33: #{tpu_custom_call.1} parent=27 // pred_check
          %p1750 = pneg %p1749
        $region34: #{tpu_custom_call.1} parent=27 // pred_check_branch
          %1752 = sbr.rel (%p1750) target = $region36
        $region35: #{tpu_custom_call.1} parent=27 // pred_region
          %v1753 = vld [vmem:[#allocation2] sm:$0xff]
          %v1754 = vld [vmem:[#allocation2 + $0x8] sm:$0xff]
          %v1755 = vld [vmem:[#allocation2 + $0x10] sm:$0xff]
          %v1756 = vld [vmem:[#allocation2 + $0x18] sm:$0xff]
          %v1757 = vld [vmem:[#allocation2 + $0x20] sm:$0xff]
          %v1758 = vld [vmem:[#allocation2 + $0x28] sm:$0xff]
          %v1759 = vld [vmem:[#allocation2 + $0x30] sm:$0xff]
          %v1760 = vld [vmem:[#allocation2 + $0x38] sm:$0xff]
          %v1761 = vld [vmem:[#allocation2 + $0x40] sm:$0xff]
          %v1762 = vld [vmem:[#allocation2 + $0x48] sm:$0xff]
          %v1763 = vld [vmem:[#allocation2 + $0x50] sm:$0xff]
          %v1764 = vld [vmem:[#allocation2 + $0x58] sm:$0xff]
          %v1765 = vld [vmem:[#allocation2 + $0x60] sm:$0xff]
          %v1766 = vld [vmem:[#allocation2 + $0x68] sm:$0xff]
          %v1767 = vld [vmem:[#allocation2 + $0x70] sm:$0xff]
          %v1768 = vld [vmem:[#allocation2 + $0x78] sm:$0xff]
          %v1769 = vmul.f32 %v1753, 0.00390625
          %v1770 = vmul.f32 %v1754, 0.00390625
          %v1771 = vmul.f32 %v1755, 0.00390625
          %v1772 = vmul.f32 %v1756, 0.00390625
          %v1773 = vmul.f32 %v1757, 0.00390625
          %v1774 = vmul.f32 %v1758, 0.00390625
          %v1775 = vmul.f32 %v1759, 0.00390625
          %v1776 = vmul.f32 %v1760, 0.00390625
          %v1777 = vmul.f32 %v1761, 0.00390625
          %v1778 = vmul.f32 %v1762, 0.00390625
          %v1779 = vmul.f32 %v1763, 0.00390625
          %v1780 = vmul.f32 %v1764, 0.00390625
          %v1781 = vmul.f32 %v1765, 0.00390625
          %v1782 = vmul.f32 %v1766, 0.00390625
          %v1783 = vmul.f32 %v1767, 0.00390625
          %v1784 = vmul.f32 %v1768, 0.00390625
          %v1785 = vld [vmem:[#allocation3] sm:$0xff]
          %v1786 = vld [vmem:[#allocation3 + $0x8] sm:$0xff]
          %v1787 = vld [vmem:[#allocation3 + $0x10] sm:$0xff]
          %v1788 = vld [vmem:[#allocation3 + $0x18] sm:$0xff]
          %v1789 = vld [vmem:[#allocation3 + $0x20] sm:$0xff]
          %v1790 = vld [vmem:[#allocation3 + $0x28] sm:$0xff]
          %v1791 = vld [vmem:[#allocation3 + $0x30] sm:$0xff]
          %v1792 = vld [vmem:[#allocation3 + $0x38] sm:$0xff]
          %v1793 = vld [vmem:[#allocation3 + $0x40] sm:$0xff]
          %v1794 = vld [vmem:[#allocation3 + $0x48] sm:$0xff]
          %v1795 = vld [vmem:[#allocation3 + $0x50] sm:$0xff]
          %v1796 = vld [vmem:[#allocation3 + $0x58] sm:$0xff]
          %v1797 = vld [vmem:[#allocation3 + $0x60] sm:$0xff]
          %v1798 = vld [vmem:[#allocation3 + $0x68] sm:$0xff]
          %v1799 = vld [vmem:[#allocation3 + $0x70] sm:$0xff]
          %v1800 = vld [vmem:[#allocation3 + $0x78] sm:$0xff]
          %v1801 = vmul.f32 %v1785, 0.00390625
          %v1802 = vmul.f32 %v1786, 0.00390625
          %v1803 = vmul.f32 %v1787, 0.00390625
          %v1804 = vmul.f32 %v1788, 0.00390625
          %v1805 = vmul.f32 %v1789, 0.00390625
          %v1806 = vmul.f32 %v1790, 0.00390625
          %v1807 = vmul.f32 %v1791, 0.00390625
          %v1808 = vmul.f32 %v1792, 0.00390625
          %v1809 = vmul.f32 %v1793, 0.00390625
          %v1810 = vmul.f32 %v1794, 0.00390625
          %v1811 = vmul.f32 %v1795, 0.00390625
          %v1812 = vmul.f32 %v1796, 0.00390625
          %v1813 = vmul.f32 %v1797, 0.00390625
          %v1814 = vmul.f32 %v1798, 0.00390625
          %v1815 = vmul.f32 %v1799, 0.00390625
          %v1816 = vmul.f32 %v1800, 0.00390625
          %v1817 = vmul.f32 %v1769, %v1769
          %v1818 = vmul.f32 %v1770, %v1770
          %v1819 = vmul.f32 %v1771, %v1771
          %v1820 = vmul.f32 %v1772, %v1772
          %v1821 = vmul.f32 %v1773, %v1773
          %v1822 = vmul.f32 %v1774, %v1774
          %v1823 = vmul.f32 %v1775, %v1775
          %v1824 = vmul.f32 %v1776, %v1776
          %v1825 = vmul.f32 %v1777, %v1777
          %v1826 = vmul.f32 %v1778, %v1778
          %v1827 = vmul.f32 %v1779, %v1779
          %v1828 = vmul.f32 %v1780, %v1780
          %v1829 = vmul.f32 %v1781, %v1781
          %v1830 = vmul.f32 %v1782, %v1782
          %v1831 = vmul.f32 %v1783, %v1783
          %v1832 = vmul.f32 %v1784, %v1784
          %v1833 = vsub.f32 %v1801, %v1817
          %v1834 = vsub.f32 %v1802, %v1818
          %v1835 = vsub.f32 %v1803, %v1819
          %v1836 = vsub.f32 %v1804, %v1820
          %v1837 = vsub.f32 %v1805, %v1821
          %v1838 = vsub.f32 %v1806, %v1822
          %v1839 = vsub.f32 %v1807, %v1823
          %v1840 = vsub.f32 %v1808, %v1824
          %v1841 = vsub.f32 %v1809, %v1825
          %v1842 = vsub.f32 %v1810, %v1826
          %v1843 = vsub.f32 %v1811, %v1827
          %v1844 = vsub.f32 %v1812, %v1828
          %v1845 = vsub.f32 %v1813, %v1829
          %v1846 = vsub.f32 %v1814, %v1830
          %v1847 = vsub.f32 %v1815, %v1831
          %v1848 = vsub.f32 %v1816, %v1832
          %v1849 = vadd.f32 %v1833, 1e-05
          %v1850 = vadd.f32 %v1834, 1e-05
          %v1851 = vadd.f32 %v1835, 1e-05
          %v1852 = vadd.f32 %v1836, 1e-05
          %v1853 = vadd.f32 %v1837, 1e-05
          %v1854 = vadd.f32 %v1838, 1e-05
          %v1855 = vadd.f32 %v1839, 1e-05
          %v1856 = vadd.f32 %v1840, 1e-05
          %v1857 = vadd.f32 %v1841, 1e-05
          %v1858 = vadd.f32 %v1842, 1e-05
          %v1859 = vadd.f32 %v1843, 1e-05
          %v1860 = vadd.f32 %v1844, 1e-05
          %v1861 = vadd.f32 %v1845, 1e-05
          %v1862 = vadd.f32 %v1846, 1e-05
          %v1863 = vadd.f32 %v1847, 1e-05
          %v1864 = vadd.f32 %v1848, 1e-05
          %v1865 = vrsqrt.pop %v1849
          %v1866 = vmul.f32 %v1865, %v1849
          %v1867 = vmul.f32 %v1866, %v1865
          %v1868 = vmul.f32 0.5, %v1867
          %v1869 = vsub.f32 1.5, %v1868
          %v1870 = vmul.f32 %v1865, %v1869
          %vm1871 = vweird.f32 %v1849
          %vm1872 = vweird.f32 %v1865
          %vm1873 = vmor %vm1871, %vm1872
          %v1874 = vsel %vm1873, %v1865, %v1870
          %v1875 = vrsqrt.pop %v1850
          %v1876 = vmul.f32 %v1875, %v1850
          %v1877 = vmul.f32 %v1876, %v1875
          %v1878 = vmul.f32 0.5, %v1877
          %v1879 = vsub.f32 1.5, %v1878
          %v1880 = vmul.f32 %v1875, %v1879
          %vm1881 = vweird.f32 %v1850
          %vm1882 = vweird.f32 %v1875
          %vm1883 = vmor %vm1881, %vm1882
          %v1884 = vsel %vm1883, %v1875, %v1880
          %v1885 = vrsqrt.pop %v1851
          %v1886 = vmul.f32 %v1885, %v1851
          %v1887 = vmul.f32 %v1886, %v1885
          %v1888 = vmul.f32 0.5, %v1887
          %v1889 = vsub.f32 1.5, %v1888
          %v1890 = vmul.f32 %v1885, %v1889
          %vm1891 = vweird.f32 %v1851
          %vm1892 = vweird.f32 %v1885
          %vm1893 = vmor %vm1891, %vm1892
          %v1894 = vsel %vm1893, %v1885, %v1890
          %v1895 = vrsqrt.pop %v1852
          %v1896 = vmul.f32 %v1895, %v1852
          %v1897 = vmul.f32 %v1896, %v1895
          %v1898 = vmul.f32 0.5, %v1897
          %v1899 = vsub.f32 1.5, %v1898
          %v1900 = vmul.f32 %v1895, %v1899
          %vm1901 = vweird.f32 %v1852
          %vm1902 = vweird.f32 %v1895
          %vm1903 = vmor %vm1901, %vm1902
          %v1904 = vsel %vm1903, %v1895, %v1900
          %v1905 = vrsqrt.pop %v1853
          %v1906 = vmul.f32 %v1905, %v1853
          %v1907 = vmul.f32 %v1906, %v1905
          %v1908 = vmul.f32 0.5, %v1907
          %v1909 = vsub.f32 1.5, %v1908
          %v1910 = vmul.f32 %v1905, %v1909
          %vm1911 = vweird.f32 %v1853
          %vm1912 = vweird.f32 %v1905
          %vm1913 = vmor %vm1911, %vm1912
          %v1914 = vsel %vm1913, %v1905, %v1910
          %v1915 = vrsqrt.pop %v1854
          %v1916 = vmul.f32 %v1915, %v1854
          %v1917 = vmul.f32 %v1916, %v1915
          %v1918 = vmul.f32 0.5, %v1917
          %v1919 = vsub.f32 1.5, %v1918
          %v1920 = vmul.f32 %v1915, %v1919
          %vm1921 = vweird.f32 %v1854
          %vm1922 = vweird.f32 %v1915
          %vm1923 = vmor %vm1921, %vm1922
          %v1924 = vsel %vm1923, %v1915, %v1920
          %v1925 = vrsqrt.pop %v1855
          %v1926 = vmul.f32 %v1925, %v1855
          %v1927 = vmul.f32 %v1926, %v1925
          %v1928 = vmul.f32 0.5, %v1927
          %v1929 = vsub.f32 1.5, %v1928
          %v1930 = vmul.f32 %v1925, %v1929
          %vm1931 = vweird.f32 %v1855
          %vm1932 = vweird.f32 %v1925
          %vm1933 = vmor %vm1931, %vm1932
          %v1934 = vsel %vm1933, %v1925, %v1930
          %v1935 = vrsqrt.pop %v1856
          %v1936 = vmul.f32 %v1935, %v1856
          %v1937 = vmul.f32 %v1936, %v1935
          %v1938 = vmul.f32 0.5, %v1937
          %v1939 = vsub.f32 1.5, %v1938
          %v1940 = vmul.f32 %v1935, %v1939
          %vm1941 = vweird.f32 %v1856
          %vm1942 = vweird.f32 %v1935
          %vm1943 = vmor %vm1941, %vm1942
          %v1944 = vsel %vm1943, %v1935, %v1940
          %v1945 = vrsqrt.pop %v1857
          %v1946 = vmul.f32 %v1945, %v1857
          %v1947 = vmul.f32 %v1946, %v1945
          %v1948 = vmul.f32 0.5, %v1947
          %v1949 = vsub.f32 1.5, %v1948
          %v1950 = vmul.f32 %v1945, %v1949
          %vm1951 = vweird.f32 %v1857
          %vm1952 = vweird.f32 %v1945
          %vm1953 = vmor %vm1951, %vm1952
          %v1954 = vsel %vm1953, %v1945, %v1950
          %v1955 = vrsqrt.pop %v1858
          %v1956 = vmul.f32 %v1955, %v1858
          %v1957 = vmul.f32 %v1956, %v1955
          %v1958 = vmul.f32 0.5, %v1957
          %v1959 = vsub.f32 1.5, %v1958
          %v1960 = vmul.f32 %v1955, %v1959
          %vm1961 = vweird.f32 %v1858
          %vm1962 = vweird.f32 %v1955
          %vm1963 = vmor %vm1961, %vm1962
          %v1964 = vsel %vm1963, %v1955, %v1960
          %v1965 = vrsqrt.pop %v1859
          %v1966 = vmul.f32 %v1965, %v1859
          %v1967 = vmul.f32 %v1966, %v1965
          %v1968 = vmul.f32 0.5, %v1967
          %v1969 = vsub.f32 1.5, %v1968
          %v1970 = vmul.f32 %v1965, %v1969
          %vm1971 = vweird.f32 %v1859
          %vm1972 = vweird.f32 %v1965
          %vm1973 = vmor %vm1971, %vm1972
          %v1974 = vsel %vm1973, %v1965, %v1970
          %v1975 = vrsqrt.pop %v1860
          %v1976 = vmul.f32 %v1975, %v1860
          %v1977 = vmul.f32 %v1976, %v1975
          %v1978 = vmul.f32 0.5, %v1977
          %v1979 = vsub.f32 1.5, %v1978
          %v1980 = vmul.f32 %v1975, %v1979
          %vm1981 = vweird.f32 %v1860
          %vm1982 = vweird.f32 %v1975
          %vm1983 = vmor %vm1981, %vm1982
          %v1984 = vsel %vm1983, %v1975, %v1980
          %v1985 = vrsqrt.pop %v1861
          %v1986 = vmul.f32 %v1985, %v1861
          %v1987 = vmul.f32 %v1986, %v1985
          %v1988 = vmul.f32 0.5, %v1987
          %v1989 = vsub.f32 1.5, %v1988
          %v1990 = vmul.f32 %v1985, %v1989
          %vm1991 = vweird.f32 %v1861
          %vm1992 = vweird.f32 %v1985
          %vm1993 = vmor %vm1991, %vm1992
          %v1994 = vsel %vm1993, %v1985, %v1990
          %v1995 = vrsqrt.pop %v1862
          %v1996 = vmul.f32 %v1995, %v1862
          %v1997 = vmul.f32 %v1996, %v1995
          %v1998 = vmul.f32 0.5, %v1997
          %v1999 = vsub.f32 1.5, %v1998
          %v2000 = vmul.f32 %v1995, %v1999
          %vm2001 = vweird.f32 %v1862
          %vm2002 = vweird.f32 %v1995
          %vm2003 = vmor %vm2001, %vm2002
          %v2004 = vsel %vm2003, %v1995, %v2000
          %v2005 = vrsqrt.pop %v1863
          %v2006 = vmul.f32 %v2005, %v1863
          %v2007 = vmul.f32 %v2006, %v2005
          %v2008 = vmul.f32 0.5, %v2007
          %v2009 = vsub.f32 1.5, %v2008
          %v2010 = vmul.f32 %v2005, %v2009
          %vm2011 = vweird.f32 %v1863
          %vm2012 = vweird.f32 %v2005
          %vm2013 = vmor %vm2011, %vm2012
          %v2014 = vsel %vm2013, %v2005, %v2010
          %v2015 = vrsqrt.pop %v1864
          %v2016 = vmul.f32 %v2015, %v1864
          %v2017 = vmul.f32 %v2016, %v2015
          %v2018 = vmul.f32 0.5, %v2017
          %v2019 = vsub.f32 1.5, %v2018
          %v2020 = vmul.f32 %v2015, %v2019
          %vm2021 = vweird.f32 %v1864
          %vm2022 = vweird.f32 %v2015
          %vm2023 = vmor %vm2021, %vm2022
          %v2024 = vsel %vm2023, %v2015, %v2020
          %v2025 = vld [vmem:[%s148] sm:$0xff]
          %v2026 = vld [vmem:[%s148 + $0x8] sm:$0xff]
          %v2027 = vld [vmem:[%s148 + $0x10] sm:$0xff]
          %v2028 = vld [vmem:[%s148 + $0x18] sm:$0xff]
          %v2029 = vld [vmem:[%s148 + $0x20] sm:$0xff]
          %v2030 = vld [vmem:[%s148 + $0x28] sm:$0xff]
          %v2031 = vld [vmem:[%s148 + $0x30] sm:$0xff]
          %v2032 = vld [vmem:[%s148 + $0x38] sm:$0xff]
          %v2033 = vld [vmem:[%s148 + $0x40] sm:$0xff]
          %v2034 = vld [vmem:[%s148 + $0x48] sm:$0xff]
          %v2035 = vld [vmem:[%s148 + $0x50] sm:$0xff]
          %v2036 = vld [vmem:[%s148 + $0x58] sm:$0xff]
          %v2037 = vld [vmem:[%s148 + $0x60] sm:$0xff]
          %v2038 = vld [vmem:[%s148 + $0x68] sm:$0xff]
          %v2039 = vld [vmem:[%s148 + $0x70] sm:$0xff]
          %v2040 = vld [vmem:[%s148 + $0x78] sm:$0xff]
          %v2041 = vld [vmem:[%s148 + $0x80] sm:$0xff]
          %v2042 = vld [vmem:[%s148 + $0x88] sm:$0xff]
          %v2043 = vld [vmem:[%s148 + $0x90] sm:$0xff]
          %v2044 = vld [vmem:[%s148 + $0x98] sm:$0xff]
          %v2045 = vld [vmem:[%s148 + $0xa0] sm:$0xff]
          %v2046 = vld [vmem:[%s148 + $0xa8] sm:$0xff]
          %v2047 = vld [vmem:[%s148 + $0xb0] sm:$0xff]
          %v2048 = vld [vmem:[%s148 + $0xb8] sm:$0xff]
          %v2049 = vld [vmem:[%s148 + $0xc0] sm:$0xff]
          %v2050 = vld [vmem:[%s148 + $0xc8] sm:$0xff]
          %v2051 = vld [vmem:[%s148 + $0xd0] sm:$0xff]
          %v2052 = vld [vmem:[%s148 + $0xd8] sm:$0xff]
          %v2053 = vld [vmem:[%s148 + $0xe0] sm:$0xff]
          %v2054 = vld [vmem:[%s148 + $0xe8] sm:$0xff]
          %v2055 = vld [vmem:[%s148 + $0xf0] sm:$0xff]
          %v2056 = vld [vmem:[%s148 + $0xf8] sm:$0xff]
          %2058 = vset.pattern.permute.xlu0 0
          %2059 = vperm.xlu0 %2058, %v1769
          %v2060 = vpop.permute.xlu0 %2059
          %2063 = vset.pattern.permute.xlu0 0
          %2064 = vperm.xlu0 %2063, %v1770
          %v2065 = vpop.permute.xlu0 %2064
          %2068 = vset.pattern.permute.xlu0 0
          %2069 = vperm.xlu0 %2068, %v1771
          %v2070 = vpop.permute.xlu0 %2069
          %2073 = vset.pattern.permute.xlu0 0
          %2074 = vperm.xlu0 %2073, %v1772
          %v2075 = vpop.permute.xlu0 %2074
          %2078 = vset.pattern.permute.xlu0 0
          %2079 = vperm.xlu0 %2078, %v1773
          %v2080 = vpop.permute.xlu0 %2079
          %2083 = vset.pattern.permute.xlu0 0
          %2084 = vperm.xlu0 %2083, %v1774
          %v2085 = vpop.permute.xlu0 %2084
          %2088 = vset.pattern.permute.xlu0 0
          %2089 = vperm.xlu0 %2088, %v1775
          %v2090 = vpop.permute.xlu0 %2089
          %2093 = vset.pattern.permute.xlu0 0
          %2094 = vperm.xlu0 %2093, %v1776
          %v2095 = vpop.permute.xlu0 %2094
          %2098 = vset.pattern.permute.xlu0 0
          %2099 = vperm.xlu0 %2098, %v1777
          %v2100 = vpop.permute.xlu0 %2099
          %2103 = vset.pattern.permute.xlu0 0
          %2104 = vperm.xlu0 %2103, %v1778
          %v2105 = vpop.permute.xlu0 %2104
          %2108 = vset.pattern.permute.xlu0 0
          %2109 = vperm.xlu0 %2108, %v1779
          %v2110 = vpop.permute.xlu0 %2109
          %2113 = vset.pattern.permute.xlu0 0
          %2114 = vperm.xlu0 %2113, %v1780
          %v2115 = vpop.permute.xlu0 %2114
          %2118 = vset.pattern.permute.xlu0 0
          %2119 = vperm.xlu0 %2118, %v1781
          %v2120 = vpop.permute.xlu0 %2119
          %2123 = vset.pattern.permute.xlu0 0
          %2124 = vperm.xlu0 %2123, %v1782
          %v2125 = vpop.permute.xlu0 %2124
          %2128 = vset.pattern.permute.xlu0 0
          %2129 = vperm.xlu0 %2128, %v1783
          %v2130 = vpop.permute.xlu0 %2129
          %2133 = vset.pattern.permute.xlu0 0
          %2134 = vperm.xlu0 %2133, %v1784
          %v2135 = vpop.permute.xlu0 %2134
          %v2137 = vsub.f32 %v2025, %v2060
          %v2138 = vsub.f32 %v2026, %v2060
          %v2139 = vsub.f32 %v2027, %v2065
          %v2140 = vsub.f32 %v2028, %v2065
          %v2141 = vsub.f32 %v2029, %v2070
          %v2142 = vsub.f32 %v2030, %v2070
          %v2143 = vsub.f32 %v2031, %v2075
          %v2144 = vsub.f32 %v2032, %v2075
          %v2145 = vsub.f32 %v2033, %v2080
          %v2146 = vsub.f32 %v2034, %v2080
          %v2147 = vsub.f32 %v2035, %v2085
          %v2148 = vsub.f32 %v2036, %v2085
          %v2149 = vsub.f32 %v2037, %v2090
          %v2150 = vsub.f32 %v2038, %v2090
          %v2151 = vsub.f32 %v2039, %v2095
          %v2152 = vsub.f32 %v2040, %v2095
          %v2153 = vsub.f32 %v2041, %v2100
          %v2154 = vsub.f32 %v2042, %v2100
          %v2155 = vsub.f32 %v2043, %v2105
          %v2156 = vsub.f32 %v2044, %v2105
          %v2157 = vsub.f32 %v2045, %v2110
          %v2158 = vsub.f32 %v2046, %v2110
          %v2159 = vsub.f32 %v2047, %v2115
          %v2160 = vsub.f32 %v2048, %v2115
          %v2161 = vsub.f32 %v2049, %v2120
          %v2162 = vsub.f32 %v2050, %v2120
          %v2163 = vsub.f32 %v2051, %v2125
          %v2164 = vsub.f32 %v2052, %v2125
          %v2165 = vsub.f32 %v2053, %v2130
          %v2166 = vsub.f32 %v2054, %v2130
          %v2167 = vsub.f32 %v2055, %v2135
          %v2168 = vsub.f32 %v2056, %v2135
          %2170 = vset.pattern.permute.xlu0 0
          %2171 = vperm.xlu0 %2170, %v1874
          %v2172 = vpop.permute.xlu0 %2171
          %2175 = vset.pattern.permute.xlu0 0
          %2176 = vperm.xlu0 %2175, %v1884
          %v2177 = vpop.permute.xlu0 %2176
          %2180 = vset.pattern.permute.xlu0 0
          %2181 = vperm.xlu0 %2180, %v1894
          %v2182 = vpop.permute.xlu0 %2181
          %2185 = vset.pattern.permute.xlu0 0
          %2186 = vperm.xlu0 %2185, %v1904
          %v2187 = vpop.permute.xlu0 %2186
          %2190 = vset.pattern.permute.xlu0 0
          %2191 = vperm.xlu0 %2190, %v1914
          %v2192 = vpop.permute.xlu0 %2191
          %2195 = vset.pattern.permute.xlu0 0
          %2196 = vperm.xlu0 %2195, %v1924
          %v2197 = vpop.permute.xlu0 %2196
          %2200 = vset.pattern.permute.xlu0 0
          %2201 = vperm.xlu0 %2200, %v1934
          %v2202 = vpop.permute.xlu0 %2201
          %2205 = vset.pattern.permute.xlu0 0
          %2206 = vperm.xlu0 %2205, %v1944
          %v2207 = vpop.permute.xlu0 %2206
          %2210 = vset.pattern.permute.xlu0 0
          %2211 = vperm.xlu0 %2210, %v1954
          %v2212 = vpop.permute.xlu0 %2211
          %2215 = vset.pattern.permute.xlu0 0
          %2216 = vperm.xlu0 %2215, %v1964
          %v2217 = vpop.permute.xlu0 %2216
          %2220 = vset.pattern.permute.xlu0 0
          %2221 = vperm.xlu0 %2220, %v1974
          %v2222 = vpop.permute.xlu0 %2221
          %2225 = vset.pattern.permute.xlu0 0
          %2226 = vperm.xlu0 %2225, %v1984
          %v2227 = vpop.permute.xlu0 %2226
          %2230 = vset.pattern.permute.xlu0 0
          %2231 = vperm.xlu0 %2230, %v1994
          %v2232 = vpop.permute.xlu0 %2231
          %2235 = vset.pattern.permute.xlu0 0
          %2236 = vperm.xlu0 %2235, %v2004
          %v2237 = vpop.permute.xlu0 %2236
          %2240 = vset.pattern.permute.xlu0 0
          %2241 = vperm.xlu0 %2240, %v2014
          %v2242 = vpop.permute.xlu0 %2241
          %2245 = vset.pattern.permute.xlu0 0
          %2246 = vperm.xlu0 %2245, %v2024
          %v2247 = vpop.permute.xlu0 %2246
          %v2249 = vmul.f32 %v2137, %v2172
          %v2250 = vmul.f32 %v2138, %v2172
          %v2251 = vmul.f32 %v2139, %v2177
          %v2252 = vmul.f32 %v2140, %v2177
          %v2253 = vmul.f32 %v2141, %v2182
          %v2254 = vmul.f32 %v2142, %v2182
          %v2255 = vmul.f32 %v2143, %v2187
          %v2256 = vmul.f32 %v2144, %v2187
          %v2257 = vmul.f32 %v2145, %v2192
          %v2258 = vmul.f32 %v2146, %v2192
          %v2259 = vmul.f32 %v2147, %v2197
          %v2260 = vmul.f32 %v2148, %v2197
          %v2261 = vmul.f32 %v2149, %v2202
          %v2262 = vmul.f32 %v2150, %v2202
          %v2263 = vmul.f32 %v2151, %v2207
          %v2264 = vmul.f32 %v2152, %v2207
          %v2265 = vmul.f32 %v2153, %v2212
          %v2266 = vmul.f32 %v2154, %v2212
          %v2267 = vmul.f32 %v2155, %v2217
          %v2268 = vmul.f32 %v2156, %v2217
          %v2269 = vmul.f32 %v2157, %v2222
          %v2270 = vmul.f32 %v2158, %v2222
          %v2271 = vmul.f32 %v2159, %v2227
          %v2272 = vmul.f32 %v2160, %v2227
          %v2273 = vmul.f32 %v2161, %v2232
          %v2274 = vmul.f32 %v2162, %v2232
          %v2275 = vmul.f32 %v2163, %v2237
          %v2276 = vmul.f32 %v2164, %v2237
          %v2277 = vmul.f32 %v2165, %v2242
          %v2278 = vmul.f32 %v2166, %v2242
          %v2279 = vmul.f32 %v2167, %v2247
          %v2280 = vmul.f32 %v2168, %v2247
          %vm2281 = vcmp.ge.f32.partialorder %v2249, 0.0
          %vm2282 = vcmp.ge.f32.partialorder %v2250, 0.0
          %vm2283 = vcmp.ge.f32.partialorder %v2251, 0.0
          %vm2284 = vcmp.ge.f32.partialorder %v2252, 0.0
          %vm2285 = vcmp.ge.f32.partialorder %v2253, 0.0
          %vm2286 = vcmp.ge.f32.partialorder %v2254, 0.0
          %vm2287 = vcmp.ge.f32.partialorder %v2255, 0.0
          %vm2288 = vcmp.ge.f32.partialorder %v2256, 0.0
          %vm2289 = vcmp.ge.f32.partialorder %v2257, 0.0
          %vm2290 = vcmp.ge.f32.partialorder %v2258, 0.0
          %vm2291 = vcmp.ge.f32.partialorder %v2259, 0.0
          %vm2292 = vcmp.ge.f32.partialorder %v2260, 0.0
          %vm2293 = vcmp.ge.f32.partialorder %v2261, 0.0
          %vm2294 = vcmp.ge.f32.partialorder %v2262, 0.0
          %vm2295 = vcmp.ge.f32.partialorder %v2263, 0.0
          %vm2296 = vcmp.ge.f32.partialorder %v2264, 0.0
          %vm2297 = vcmp.ge.f32.partialorder %v2265, 0.0
          %vm2298 = vcmp.ge.f32.partialorder %v2266, 0.0
          %vm2299 = vcmp.ge.f32.partialorder %v2267, 0.0
          %vm2300 = vcmp.ge.f32.partialorder %v2268, 0.0
          %vm2301 = vcmp.ge.f32.partialorder %v2269, 0.0
          %vm2302 = vcmp.ge.f32.partialorder %v2270, 0.0
          %vm2303 = vcmp.ge.f32.partialorder %v2271, 0.0
          %vm2304 = vcmp.ge.f32.partialorder %v2272, 0.0
          %vm2305 = vcmp.ge.f32.partialorder %v2273, 0.0
          %vm2306 = vcmp.ge.f32.partialorder %v2274, 0.0
          %vm2307 = vcmp.ge.f32.partialorder %v2275, 0.0
          %vm2308 = vcmp.ge.f32.partialorder %v2276, 0.0
          %vm2309 = vcmp.ge.f32.partialorder %v2277, 0.0
          %vm2310 = vcmp.ge.f32.partialorder %v2278, 0.0
          %vm2311 = vcmp.ge.f32.partialorder %v2279, 0.0
          %vm2312 = vcmp.ge.f32.partialorder %v2280, 0.0
          %v2313 = vmul.f32 %v2249, 0.2
          %v2314 = vmul.f32 %v2250, 0.2
          %v2315 = vmul.f32 %v2251, 0.2
          %v2316 = vmul.f32 %v2252, 0.2
          %v2317 = vmul.f32 %v2253, 0.2
          %v2318 = vmul.f32 %v2254, 0.2
          %v2319 = vmul.f32 %v2255, 0.2
          %v2320 = vmul.f32 %v2256, 0.2
          %v2321 = vmul.f32 %v2257, 0.2
          %v2322 = vmul.f32 %v2258, 0.2
          %v2323 = vmul.f32 %v2259, 0.2
          %v2324 = vmul.f32 %v2260, 0.2
          %v2325 = vmul.f32 %v2261, 0.2
          %v2326 = vmul.f32 %v2262, 0.2
          %v2327 = vmul.f32 %v2263, 0.2
          %v2328 = vmul.f32 %v2264, 0.2
          %v2329 = vmul.f32 %v2265, 0.2
          %v2330 = vmul.f32 %v2266, 0.2
          %v2331 = vmul.f32 %v2267, 0.2
          %v2332 = vmul.f32 %v2268, 0.2
          %v2333 = vmul.f32 %v2269, 0.2
          %v2334 = vmul.f32 %v2270, 0.2
          %v2335 = vmul.f32 %v2271, 0.2
          %v2336 = vmul.f32 %v2272, 0.2
          %v2337 = vmul.f32 %v2273, 0.2
          %v2338 = vmul.f32 %v2274, 0.2
          %v2339 = vmul.f32 %v2275, 0.2
          %v2340 = vmul.f32 %v2276, 0.2
          %v2341 = vmul.f32 %v2277, 0.2
          %v2342 = vmul.f32 %v2278, 0.2
          %v2343 = vmul.f32 %v2279, 0.2
          %v2344 = vmul.f32 %v2280, 0.2
          %v2345 = vsel %vm2281, %v2249, %v2313
          %v2346 = vsel %vm2282, %v2250, %v2314
          %v2347 = vsel %vm2283, %v2251, %v2315
          %v2348 = vsel %vm2284, %v2252, %v2316
          %v2349 = vsel %vm2285, %v2253, %v2317
          %v2350 = vsel %vm2286, %v2254, %v2318
          %v2351 = vsel %vm2287, %v2255, %v2319
          %v2352 = vsel %vm2288, %v2256, %v2320
          %v2353 = vsel %vm2289, %v2257, %v2321
          %v2354 = vsel %vm2290, %v2258, %v2322
          %v2355 = vsel %vm2291, %v2259, %v2323
          %v2356 = vsel %vm2292, %v2260, %v2324
          %v2357 = vsel %vm2293, %v2261, %v2325
          %v2358 = vsel %vm2294, %v2262, %v2326
          %v2359 = vsel %vm2295, %v2263, %v2327
          %v2360 = vsel %vm2296, %v2264, %v2328
          %v2361 = vsel %vm2297, %v2265, %v2329
          %v2362 = vsel %vm2298, %v2266, %v2330
          %v2363 = vsel %vm2299, %v2267, %v2331
          %v2364 = vsel %vm2300, %v2268, %v2332
          %v2365 = vsel %vm2301, %v2269, %v2333
          %v2366 = vsel %vm2302, %v2270, %v2334
          %v2367 = vsel %vm2303, %v2271, %v2335
          %v2368 = vsel %vm2304, %v2272, %v2336
          %v2369 = vsel %vm2305, %v2273, %v2337
          %v2370 = vsel %vm2306, %v2274, %v2338
          %v2371 = vsel %vm2307, %v2275, %v2339
          %v2372 = vsel %vm2308, %v2276, %v2340
          %v2373 = vsel %vm2309, %v2277, %v2341
          %v2374 = vsel %vm2310, %v2278, %v2342
          %v2375 = vsel %vm2311, %v2279, %v2343
          %v2376 = vsel %vm2312, %v2280, %v2344
          %2377 = vst [vmem:[%s148] sm:$0xff] %v2345
          %2378 = vst [vmem:[%s148 + $0x8] sm:$0xff] %v2346
          %2379 = vst [vmem:[%s148 + $0x10] sm:$0xff] %v2347
          %2380 = vst [vmem:[%s148 + $0x18] sm:$0xff] %v2348
          %2381 = vst [vmem:[%s148 + $0x20] sm:$0xff] %v2349
          %2382 = vst [vmem:[%s148 + $0x28] sm:$0xff] %v2350
          %2383 = vst [vmem:[%s148 + $0x30] sm:$0xff] %v2351
          %2384 = vst [vmem:[%s148 + $0x38] sm:$0xff] %v2352
          %2385 = vst [vmem:[%s148 + $0x40] sm:$0xff] %v2353
          %2386 = vst [vmem:[%s148 + $0x48] sm:$0xff] %v2354
          %2387 = vst [vmem:[%s148 + $0x50] sm:$0xff] %v2355
          %2388 = vst [vmem:[%s148 + $0x58] sm:$0xff] %v2356
          %2389 = vst [vmem:[%s148 + $0x60] sm:$0xff] %v2357
          %2390 = vst [vmem:[%s148 + $0x68] sm:$0xff] %v2358
          %2391 = vst [vmem:[%s148 + $0x70] sm:$0xff] %v2359
          %2392 = vst [vmem:[%s148 + $0x78] sm:$0xff] %v2360
          %2393 = vst [vmem:[%s148 + $0x80] sm:$0xff] %v2361
          %2394 = vst [vmem:[%s148 + $0x88] sm:$0xff] %v2362
          %2395 = vst [vmem:[%s148 + $0x90] sm:$0xff] %v2363
          %2396 = vst [vmem:[%s148 + $0x98] sm:$0xff] %v2364
          %2397 = vst [vmem:[%s148 + $0xa0] sm:$0xff] %v2365
          %2398 = vst [vmem:[%s148 + $0xa8] sm:$0xff] %v2366
          %2399 = vst [vmem:[%s148 + $0xb0] sm:$0xff] %v2367
          %2400 = vst [vmem:[%s148 + $0xb8] sm:$0xff] %v2368
          %2401 = vst [vmem:[%s148 + $0xc0] sm:$0xff] %v2369
          %2402 = vst [vmem:[%s148 + $0xc8] sm:$0xff] %v2370
          %2403 = vst [vmem:[%s148 + $0xd0] sm:$0xff] %v2371
          %2404 = vst [vmem:[%s148 + $0xd8] sm:$0xff] %v2372
          %2405 = vst [vmem:[%s148 + $0xe0] sm:$0xff] %v2373
          %2406 = vst [vmem:[%s148 + $0xe8] sm:$0xff] %v2374
          %2407 = vst [vmem:[%s148 + $0xf0] sm:$0xff] %v2375
          %2408 = vst [vmem:[%s148 + $0xf8] sm:$0xff] %v2376
        $region36: #{tpu_custom_call.1} parent=27 // pred_fallthru
          _
        %s2409 = sand.u32 %s83, 1
        %s2410 = scalar_lea.sflag [#allocation5], %s2409
        %s2411 = sand.u32 %s83, 1
        %s2412 = smul.addr %s2411, 256
        %s2413 = scalar_lea.vmem [#allocation4], %s2412
        // Predicated region
        $region37: #{tpu_custom_call.1} parent=27 // pred_check
          %p2414 = pneg %p93
        $region38: #{tpu_custom_call.1} parent=27 // pred_check_branch
          %2416 = sbr.rel (%p2414) target = $region40
        $region39: #{tpu_custom_call.1} parent=27 // pred_region
          %2418 = vsyncadd %s2410, 0
          %s2419 = smul.addr %s20, 32
          %s2420 = smul.addr %s2419, 8
          %s2421 = scalar_lea.hbm %s2, %s2420
          %s2422 = sshll.u32 %s2413, 4
          %s2423 = int_to_ptr.vmem [resolvable:$true] %s2422
          %s2424 = sshll.u32 %s2421, 4
          %s2425 = int_to_ptr.hbm [resolvable:$true] %s2424
          %2430 = dma.vmem_to_hbm [thread:$0]  %s2423, 4096, %s2425, %s2410, 256, 256, 16
        $region40: #{tpu_custom_call.1} parent=27 // pred_fallthru
          _
      $region28: #{tpu_custom_call.1} parent=5 // pred_fallthru
        _
      %p2431 = scmp.le.s32.totalorder 2, %s11
      // Predicated region
      $region41: #{tpu_custom_call.1} parent=5 // pred_check
        %p2432 = pneg %p2431
      $region42: #{tpu_custom_call.1} parent=5 // pred_check_branch
        %2434 = sbr.rel (%p2432) target = $region44
      $region43: #{tpu_custom_call.1} parent=5 // pred_region
        %s2435 = ssub.s32 %s11, 2
        // Predicated region
        $region45: #{tpu_custom_call.1} parent=43 // pred_check
          %p2436 = pneg %p99
        $region46: #{tpu_custom_call.1} parent=43 // pred_check_branch
          %2438 = sbr.rel (%p2436) target = $region48
        $region47: #{tpu_custom_call.1} parent=43 // pred_region
          %s2439 = sand.u32 %s84, 1
          %s2440 = scalar_lea.sflag [#allocation5], %s2439
          %s2441 = sand.u32 %s84, 1
          %s2442 = smul.addr %s2441, 256
          %s2443 = scalar_lea.vmem [#allocation4], %s2442
          %2445 = dma.done %s2440, 4096
        $region48: #{tpu_custom_call.1} parent=43 // pred_fallthru
          _
      $region44: #{tpu_custom_call.1} parent=5 // pred_fallthru
        _
    $region6: #{tpu_custom_call.1} parent=1 // loop_footer
      %s15 = sadd.s32 1, %s11
    $region7: #{tpu_custom_call.1} parent=1 // loop_footer_branch
      %10 = sbr.rel target = $region3
    $region8: #{tpu_custom_call.1} parent=1 // loop_exit
      _
    %2446 = vsyncpa [#allocation5], 1
    %s2447 = scalar_lea.sflag [#allocation5], 1
    %2448 = vsyncpa %s2447, 1

</llo_original>
